<compile_context>
chip_gen: v7x
topology: tpu7x:2x2x1
jax: 0.10.0
libtpu: 0.0.40
codegen_flags: <defaults>
</compile_context>

<pallas_src>
import jax
import jax.numpy as jnp
from jax import lax
from jax.experimental import pallas as pl
from jax.experimental.pallas import tpu as pltpu

# ---- small, forward-consistent shapes ----
B, T = 2, 8        # batch, max sequence length
E = 32             # char_embed_size
H = 32             # hidden_size (per direction)
NT = 4             # num_tags
NT_PAD = 128       # lane-dense padded logits width (wrapper slices [:NT])
VOCAB = 50         # char_vocab_size


def cws_kernel(mask_ref, x_ref, win_ref, bin_ref, whh_ref, wlin_ref, blin_ref,
               logits_ref, out_sc):
    # Fused input projection for BOTH directions and ALL timesteps in one MXU op:
    # row block t of xg = [fwd gates for time t | bwd gates for time T-1-t],
    # gate layout interleaved as [i_f i_b | f_f f_b | g_f g_b | o_f o_b].
    xg = (jnp.dot(x_ref[...], win_ref[...], preferred_element_type=jnp.float32)
          + bin_ref[...])                                           # (T*B, 8H)
    mask = mask_ref[...]                                            # (T*B, 2H)
    whh = whh_ref[...]                                              # (2H, 8H) block-diag

    hc = jnp.zeros((B, 2 * H), jnp.float32)    # [h_fwd | h_bwd]
    cc = jnp.zeros((B, 2 * H), jnp.float32)    # [c_fwd | c_bwd]

    # Fully unrolled recurrence (T static, both directions interleaved per step).
    for t in range(T):
        r0 = t * B
        tb = T - 1 - t
        g = xg[r0:r0 + B, :] + jnp.dot(hc, whh,
                                       preferred_element_type=jnp.float32)  # (B, 8H)
        s = jax.nn.sigmoid(g)                  # full-vreg transcendentals
        th = jnp.tanh(g)
        i = s[:, 0:2 * H]
        f = s[:, 2 * H:4 * H]
        gg = th[:, 4 * H:6 * H]
        o = s[:, 6 * H:8 * H]
        c_new = f * cc + i * gg
        h_new = o * jnp.tanh(c_new)
        m = mask[r0:r0 + B, :]                 # [mask(t) | mask(T-1-t)], pre-broadcast
        h_out = m * h_new                      # zeros on padding (pad_packed)
        out_sc[r0:r0 + B, 0:H] = h_out[:, 0:H]                     # fwd output @ t
        out_sc[tb * B:tb * B + B, H:2 * H] = h_out[:, H:2 * H]     # bwd output @ T-1-t
        hc = h_out + (1.0 - m) * hc            # masked steps do not advance state
        cc = m * c_new + (1.0 - m) * cc

    # Linear(2H -> NT) as ONE matmul against the stacked weight, padded to a
    # lane-dense 128-wide output.
    logits_ref[...] = (jnp.dot(out_sc[...], wlin_ref[...],
                               preferred_element_type=jnp.float32)
                       + blin_ref[...])


def _interleave_gates(a, b):
    """a, b: (K, 4H) with PyTorch gate order [i|f|g|o] -> (K, 8H) interleaved
    [i_a i_b | f_a f_b | g_a g_b | o_a o_b]."""
    k = a.shape[0]
    return jnp.stack([a.reshape(k, 4, H), b.reshape(k, 4, H)], axis=2).reshape(k, 8 * H)


def cws_forward(params, ids, x_len):
    """ids: int32 [B, T] padded char ids; x_len: int32 [B].
    Returns (pred [B, T] int32, logits [B, T, NT])."""
    emb = params["char_emb"][ids].astype(jnp.float32)               # [B, T, E] (gather = glue)
    # embed_dropout: eval mode -> identity
    emb_tm = jnp.transpose(emb, (1, 0, 2))                          # [T, B, E] time-major
    # row block t = [emb(t) | emb(T-1-t)]  -> feeds fwd and bwd halves at once
    x_cat = jnp.concatenate([emb_tm, emb_tm[::-1]], axis=2).reshape(T * B, 2 * E)

    mask = (jnp.arange(T)[:, None] < x_len[None, :]).astype(jnp.float32)   # [T, B]
    mask_f = jnp.broadcast_to(mask[:, :, None], (T, B, H))
    mask_b = jnp.broadcast_to(mask[::-1, :, None], (T, B, H))
    mask_cat = jnp.concatenate([mask_f, mask_b], axis=2).reshape(T * B, 2 * H)

    # Fused, gate-interleaved, block-diagonal weights (pure XLA glue).
    ze = jnp.zeros((E, 4 * H), jnp.float32)
    zh = jnp.zeros((H, 4 * H), jnp.float32)
    w_in = jnp.concatenate([_interleave_gates(params["wih_f"], ze),
                            _interleave_gates(ze, params["wih_b"])], axis=0)   # (2E, 8H)
    b_in = _interleave_gates(params["b_f"], params["b_b"])                     # (1, 8H)
    whh = jnp.concatenate([_interleave_gates(params["whh_f"], zh),
                           _interleave_gates(zh, params["whh_b"])], axis=0)    # (2H, 8H)
    w_lin = jnp.concatenate([params["wlin_f"], params["wlin_b"]], axis=0)      # (2H, NT)
    w_lin = jnp.pad(w_lin, ((0, 0), (0, NT_PAD - NT)))                         # (2H, 128)
    b_lin = jnp.pad(params["blin"], ((0, 0), (0, NT_PAD - NT)))                # (1, 128)

    vmem = pl.BlockSpec(memory_space=pltpu.MemorySpace.VMEM)
    logits_flat = pl.pallas_call(
        cws_kernel,
        out_shape=jax.ShapeDtypeStruct((T * B, NT_PAD), jnp.float32),
        in_specs=[vmem] * 7,
        out_specs=vmem,
        scratch_shapes=[pltpu.VMEM((T * B, 2 * H), jnp.float32)],   # combined BiLSTM outputs
    )(mask_cat, x_cat, w_in, b_in, whh, w_lin, b_lin)

    logits = jnp.transpose(logits_flat[:, :NT].reshape(T, B, NT), (1, 0, 2))   # [B, T, NT]
    # softmax is monotone -> argmax(softmax(logits)) == argmax(logits)
    pred = jnp.argmax(logits, axis=-1).astype(jnp.int32)
    return pred, logits


def reference_forward(params, ids, x_len):
    """Pure-JAX reference with identical semantics (for a correctness check)."""
    emb = params["char_emb"][ids].astype(jnp.float32)              # [B, T, E]
    mask = (jnp.arange(T)[None, :] < x_len[:, None]).astype(jnp.float32)  # [B, T]

    def run_dir(wih, whh, b, reverse):
        xg = jnp.einsum("bte,eg->btg", emb, wih) + b               # [B, T, 4H]

        def step(carry, inp):
            h, c = carry
            gx, m = inp
            g = gx + h @ whh
            i = jax.nn.sigmoid(g[:, :H]); f = jax.nn.sigmoid(g[:, H:2 * H])
            gg = jnp.tanh(g[:, 2 * H:3 * H]); o = jax.nn.sigmoid(g[:, 3 * H:])
            c_new = f * c + i * gg
            h_new = o * jnp.tanh(c_new)
            m = m[:, None]
            return (m * h_new + (1 - m) * h, m * c_new + (1 - m) * c), m * h_new

        xs = (jnp.transpose(xg, (1, 0, 2)), jnp.transpose(mask, (1, 0)))
        z = jnp.zeros((B, H), jnp.float32)
        _, outs = lax.scan(step, (z, z), xs, reverse=reverse)
        return jnp.transpose(outs, (1, 0, 2))                      # [B, T, H]

    out_f = run_dir(params["wih_f"], params["whh_f"], params["b_f"], False)
    out_b = run_dir(params["wih_b"], params["whh_b"], params["b_b"], True)
    logits = out_f @ params["wlin_f"] + out_b @ params["wlin_b"] + params["blin"]
    return jnp.argmax(logits, axis=-1).astype(jnp.int32), logits


def init_params(key):
    k = 1.0 / jnp.sqrt(jnp.float32(H))
    ks = jax.random.split(key, 14)
    u = lambda kk, shape: jax.random.uniform(kk, shape, jnp.float32, -k, k)
    return {
        "char_emb": jax.random.normal(ks[0], (VOCAB, E), jnp.float32),
        # LSTM weights stored pre-transposed: [in, 4H] / [H, 4H]; bias = b_ih + b_hh
        "wih_f": u(ks[1], (E, 4 * H)), "whh_f": u(ks[2], (H, 4 * H)),
        "b_f": u(ks[3], (1, 4 * H)) + u(ks[4], (1, 4 * H)),
        "wih_b": u(ks[5], (E, 4 * H)), "whh_b": u(ks[6], (H, 4 * H)),
        "b_b": u(ks[7], (1, 4 * H)) + u(ks[8], (1, 4 * H)),
        # Linear(2H -> NT): split into forward / backward halves, pre-transposed
        "wlin_f": u(ks[9], (H, NT)), "wlin_b": u(ks[10], (H, NT)),
        "blin": u(ks[11], (1, NT)),
    }


if __name__ == "__main__":
    key = jax.random.PRNGKey(0)
    pkey, dkey = jax.random.split(key)
    params = init_params(pkey)

    # Deterministic example batch: padded char ids (column 0 of sents) + lengths.
    x_len = jnp.array([8, 6], dtype=jnp.int32)                     # sorted desc (pack_padded)
    ids = jax.random.randint(dkey, (B, T), 1, VOCAB, dtype=jnp.int32)
    ids = ids * (jnp.arange(T)[None, :] < x_len[:, None])          # pad with id 0

    pred, logits = cws_forward(params, ids, x_len)
    jax.block_until_ready((pred, logits))

    pred_ref, logits_ref = reference_forward(params, ids, x_len)
    assert jnp.allclose(logits, logits_ref, atol=1e-4, rtol=1e-4)
    assert bool(jnp.all(pred == pred_ref))
    print("KERNEL_OK")
</pallas_src>

<mosaic_0001>
module attributes {stable_mosaic.version = 11 : i64} {
  func.func @cws_kernel(%arg0: memref<16x64xf32, #tpu.memory_space<vmem>>, %arg1: memref<16x64xf32, #tpu.memory_space<vmem>>, %arg2: memref<64x256xf32, #tpu.memory_space<vmem>>, %arg3: memref<1x256xf32, #tpu.memory_space<vmem>>, %arg4: memref<64x256xf32, #tpu.memory_space<vmem>>, %arg5: memref<64x128xf32, #tpu.memory_space<vmem>>, %arg6: memref<1x128xf32, #tpu.memory_space<vmem>>, %arg7: memref<16x128xf32, #tpu.memory_space<vmem>>, %arg8: memref<16x64xf32, #tpu.memory_space<vmem>>) attributes {dimension_semantics = [], scalar_prefetch = 0 : i64, scratch_operands = 1 : i64, tpu.core_type = #tpu.core_type<tc>} {
    %c0 = arith.constant 0 : index
    %c0_0 = arith.constant 0 : index
    %0 = vector.load %arg1[%c0, %c0_0] : memref<16x64xf32, #tpu.memory_space<vmem>>, vector<16x64xf32>
    %c0_1 = arith.constant 0 : index
    %c0_2 = arith.constant 0 : index
    %1 = vector.load %arg2[%c0_1, %c0_2] : memref<64x256xf32, #tpu.memory_space<vmem>>, vector<64x256xf32>
    %cst = arith.constant dense<0.000000e+00> : vector<16x256xf32>
    %2 = tpu.matmul %0, %1, %cst {dimension_numbers = #tpu.dot_dimension_numbers<[1], [0], [0], [1], [0, 0, 1, 1], [], []>} : vector<16x64xf32>, vector<64x256xf32>, vector<16x256xf32> -> vector<16x256xf32>
    %c0_3 = arith.constant 0 : index
    %c0_4 = arith.constant 0 : index
    %3 = vector.load %arg3[%c0_3, %c0_4] : memref<1x256xf32, #tpu.memory_space<vmem>>, vector<1x256xf32>
    %4 = vector.broadcast %3 : vector<1x256xf32> to vector<16x256xf32>
    %5 = arith.addf %2, %4 : vector<16x256xf32>
    %c0_5 = arith.constant 0 : index
    %c0_6 = arith.constant 0 : index
    %6 = vector.load %arg0[%c0_5, %c0_6] : memref<16x64xf32, #tpu.memory_space<vmem>>, vector<16x64xf32>
    %c0_7 = arith.constant 0 : index
    %c0_8 = arith.constant 0 : index
    %7 = vector.load %arg4[%c0_7, %c0_8] : memref<64x256xf32, #tpu.memory_space<vmem>>, vector<64x256xf32>
    %cst_9 = arith.constant 0.000000e+00 : f32
    %8 = vector.broadcast %cst_9 : f32 to vector<2x64xf32>
    %cst_10 = arith.constant 0.000000e+00 : f32
    %9 = vector.broadcast %cst_10 : f32 to vector<2x64xf32>
    %10 = vector.extract_strided_slice %5 {offsets = [0, 0], sizes = [2, 256], strides = [1, 1]} : vector<16x256xf32> to vector<2x256xf32>
    %cst_11 = arith.constant dense<0.000000e+00> : vector<2x256xf32>
    %11 = tpu.matmul %8, %7, %cst_11 {dimension_numbers = #tpu.dot_dimension_numbers<[1], [0], [0], [1], [0, 0, 1, 1], [], []>} : vector<2x64xf32>, vector<64x256xf32>, vector<2x256xf32> -> vector<2x256xf32>
    %12 = arith.addf %10, %11 : vector<2x256xf32>
    %13 = arith.negf %12 : vector<2x256xf32>
    %14 = math.exp %13 : vector<2x256xf32>
    %cst_12 = arith.constant 1.000000e+00 : f32
    %15 = vector.broadcast %cst_12 : f32 to vector<2x256xf32>
    %16 = arith.addf %15, %14 : vector<2x256xf32>
    %17 = arith.divf %15, %16 : vector<2x256xf32>
    %18 = math.tanh %12 : vector<2x256xf32>
    %19 = vector.extract_strided_slice %17 {offsets = [0, 0], sizes = [2, 64], strides = [1, 1]} : vector<2x256xf32> to vector<2x64xf32>
    %20 = vector.extract_strided_slice %17 {offsets = [0, 64], sizes = [2, 64], strides = [1, 1]} : vector<2x256xf32> to vector<2x64xf32>
    %21 = vector.extract_strided_slice %18 {offsets = [0, 128], sizes = [2, 64], strides = [1, 1]} : vector<2x256xf32> to vector<2x64xf32>
    %22 = vector.extract_strided_slice %17 {offsets = [0, 192], sizes = [2, 64], strides = [1, 1]} : vector<2x256xf32> to vector<2x64xf32>
    %23 = arith.mulf %20, %9 : vector<2x64xf32>
    %24 = arith.mulf %19, %21 : vector<2x64xf32>
    %25 = arith.addf %23, %24 : vector<2x64xf32>
    %26 = math.tanh %25 : vector<2x64xf32>
    %27 = arith.mulf %22, %26 : vector<2x64xf32>
    %28 = vector.extract_strided_slice %6 {offsets = [0, 0], sizes = [2, 64], strides = [1, 1]} : vector<16x64xf32> to vector<2x64xf32>
    %29 = arith.mulf %28, %27 : vector<2x64xf32>
    %30 = vector.extract_strided_slice %29 {offsets = [0, 0], sizes = [2, 32], strides = [1, 1]} : vector<2x64xf32> to vector<2x32xf32>
    %c0_13 = arith.constant 0 : index
    %c0_14 = arith.constant 0 : index
    %31 = vector.load %arg8[%c0_13, %c0_14] : memref<16x64xf32, #tpu.memory_space<vmem>>, vector<2x32xf32>
    tpu.vector_store %arg8[%c0_13, %c0_14], %30 {strides = array<i32>} : memref<16x64xf32, #tpu.memory_space<vmem>>, vector<2x32xf32>,
    %32 = vector.extract_strided_slice %29 {offsets = [0, 32], sizes = [2, 32], strides = [1, 1]} : vector<2x64xf32> to vector<2x32xf32>
    %c14 = arith.constant 14 : index
    %c32 = arith.constant 32 : index
    %33 = vector.load %arg8[%c14, %c32] : memref<16x64xf32, #tpu.memory_space<vmem>>, vector<2x32xf32>
    tpu.vector_store %arg8[%c14, %c32], %32 {strides = array<i32>} : memref<16x64xf32, #tpu.memory_space<vmem>>, vector<2x32xf32>,
    %cst_15 = arith.constant 1.000000e+00 : f32
    %34 = vector.broadcast %cst_15 : f32 to vector<2x64xf32>
    %35 = arith.subf %34, %28 : vector<2x64xf32>
    %36 = arith.mulf %35, %8 : vector<2x64xf32>
    %37 = arith.addf %29, %36 : vector<2x64xf32>
    %38 = arith.mulf %28, %25 : vector<2x64xf32>
    %cst_16 = arith.constant 1.000000e+00 : f32
    %39 = vector.broadcast %cst_16 : f32 to vector<2x64xf32>
    %40 = arith.subf %39, %28 : vector<2x64xf32>
    %41 = arith.mulf %40, %9 : vector<2x64xf32>
    %42 = arith.addf %38, %41 : vector<2x64xf32>
    %43 = vector.extract_strided_slice %5 {offsets = [2, 0], sizes = [2, 256], strides = [1, 1]} : vector<16x256xf32> to vector<2x256xf32>
    %cst_17 = arith.constant dense<0.000000e+00> : vector<2x256xf32>
    %44 = tpu.matmul %37, %7, %cst_17 {dimension_numbers = #tpu.dot_dimension_numbers<[1], [0], [0], [1], [0, 0, 1, 1], [], []>} : vector<2x64xf32>, vector<64x256xf32>, vector<2x256xf32> -> vector<2x256xf32>
    %45 = arith.addf %43, %44 : vector<2x256xf32>
    %46 = arith.negf %45 : vector<2x256xf32>
    %47 = math.exp %46 : vector<2x256xf32>
    %cst_18 = arith.constant 1.000000e+00 : f32
    %48 = vector.broadcast %cst_18 : f32 to vector<2x256xf32>
    %49 = arith.addf %48, %47 : vector<2x256xf32>
    %50 = arith.divf %48, %49 : vector<2x256xf32>
    %51 = math.tanh %45 : vector<2x256xf32>
    %52 = vector.extract_strided_slice %50 {offsets = [0, 0], sizes = [2, 64], strides = [1, 1]} : vector<2x256xf32> to vector<2x64xf32>
    %53 = vector.extract_strided_slice %50 {offsets = [0, 64], sizes = [2, 64], strides = [1, 1]} : vector<2x256xf32> to vector<2x64xf32>
    %54 = vector.extract_strided_slice %51 {offsets = [0, 128], sizes = [2, 64], strides = [1, 1]} : vector<2x256xf32> to vector<2x64xf32>
    %55 = vector.extract_strided_slice %50 {offsets = [0, 192], sizes = [2, 64], strides = [1, 1]} : vector<2x256xf32> to vector<2x64xf32>
    %56 = arith.mulf %53, %42 : vector<2x64xf32>
    %57 = arith.mulf %52, %54 : vector<2x64xf32>
    %58 = arith.addf %56, %57 : vector<2x64xf32>
    %59 = math.tanh %58 : vector<2x64xf32>
    %60 = arith.mulf %55, %59 : vector<2x64xf32>
    %61 = vector.extract_strided_slice %6 {offsets = [2, 0], sizes = [2, 64], strides = [1, 1]} : vector<16x64xf32> to vector<2x64xf32>
    %62 = arith.mulf %61, %60 : vector<2x64xf32>
    %63 = vector.extract_strided_slice %62 {offsets = [0, 0], sizes = [2, 32], strides = [1, 1]} : vector<2x64xf32> to vector<2x32xf32>
    %c2 = arith.constant 2 : index
    %c0_19 = arith.constant 0 : index
    %64 = vector.load %arg8[%c2, %c0_19] : memref<16x64xf32, #tpu.memory_space<vmem>>, vector<2x32xf32>
    tpu.vector_store %arg8[%c2, %c0_19], %63 {strides = array<i32>} : memref<16x64xf32, #tpu.memory_space<vmem>>, vector<2x32xf32>,
    %65 = vector.extract_strided_slice %62 {offsets = [0, 32], sizes = [2, 32], strides = [1, 1]} : vector<2x64xf32> to vector<2x32xf32>
    %c12 = arith.constant 12 : index
    %c32_20 = arith.constant 32 : index
    %66 = vector.load %arg8[%c12, %c32_20] : memref<16x64xf32, #tpu.memory_space<vmem>>, vector<2x32xf32>
    tpu.vector_store %arg8[%c12, %c32_20], %65 {strides = array<i32>} : memref<16x64xf32, #tpu.memory_space<vmem>>, vector<2x32xf32>,
    %cst_21 = arith.constant 1.000000e+00 : f32
    %67 = vector.broadcast %cst_21 : f32 to vector<2x64xf32>
    %68 = arith.subf %67, %61 : vector<2x64xf32>
    %69 = arith.mulf %68, %37 : vector<2x64xf32>
    %70 = arith.addf %62, %69 : vector<2x64xf32>
    %71 = arith.mulf %61, %58 : vector<2x64xf32>
    %cst_22 = arith.constant 1.000000e+00 : f32
    %72 = vector.broadcast %cst_22 : f32 to vector<2x64xf32>
    %73 = arith.subf %72, %61 : vector<2x64xf32>
    %74 = arith.mulf %73, %42 : vector<2x64xf32>
    %75 = arith.addf %71, %74 : vector<2x64xf32>
    %76 = vector.extract_strided_slice %5 {offsets = [4, 0], sizes = [2, 256], strides = [1, 1]} : vector<16x256xf32> to vector<2x256xf32>
    %cst_23 = arith.constant dense<0.000000e+00> : vector<2x256xf32>
    %77 = tpu.matmul %70, %7, %cst_23 {dimension_numbers = #tpu.dot_dimension_numbers<[1], [0], [0], [1], [0, 0, 1, 1], [], []>} : vector<2x64xf32>, vector<64x256xf32>, vector<2x256xf32> -> vector<2x256xf32>
    %78 = arith.addf %76, %77 : vector<2x256xf32>
    %79 = arith.negf %78 : vector<2x256xf32>
    %80 = math.exp %79 : vector<2x256xf32>
    %cst_24 = arith.constant 1.000000e+00 : f32
    %81 = vector.broadcast %cst_24 : f32 to vector<2x256xf32>
    %82 = arith.addf %81, %80 : vector<2x256xf32>
    %83 = arith.divf %81, %82 : vector<2x256xf32>
    %84 = math.tanh %78 : vector<2x256xf32>
    %85 = vector.extract_strided_slice %83 {offsets = [0, 0], sizes = [2, 64], strides = [1, 1]} : vector<2x256xf32> to vector<2x64xf32>
    %86 = vector.extract_strided_slice %83 {offsets = [0, 64], sizes = [2, 64], strides = [1, 1]} : vector<2x256xf32> to vector<2x64xf32>
    %87 = vector.extract_strided_slice %84 {offsets = [0, 128], sizes = [2, 64], strides = [1, 1]} : vector<2x256xf32> to vector<2x64xf32>
    %88 = vector.extract_strided_slice %83 {offsets = [0, 192], sizes = [2, 64], strides = [1, 1]} : vector<2x256xf32> to vector<2x64xf32>
    %89 = arith.mulf %86, %75 : vector<2x64xf32>
    %90 = arith.mulf %85, %87 : vector<2x64xf32>
    %91 = arith.addf %89, %90 : vector<2x64xf32>
    %92 = math.tanh %91 : vector<2x64xf32>
    %93 = arith.mulf %88, %92 : vector<2x64xf32>
    %94 = vector.extract_strided_slice %6 {offsets = [4, 0], sizes = [2, 64], strides = [1, 1]} : vector<16x64xf32> to vector<2x64xf32>
    %95 = arith.mulf %94, %93 : vector<2x64xf32>
    %96 = vector.extract_strided_slice %95 {offsets = [0, 0], sizes = [2, 32], strides = [1, 1]} : vector<2x64xf32> to vector<2x32xf32>
    %c4 = arith.constant 4 : index
    %c0_25 = arith.constant 0 : index
    %97 = vector.load %arg8[%c4, %c0_25] : memref<16x64xf32, #tpu.memory_space<vmem>>, vector<2x32xf32>
    tpu.vector_store %arg8[%c4, %c0_25], %96 {strides = array<i32>} : memref<16x64xf32, #tpu.memory_space<vmem>>, vector<2x32xf32>,
    %98 = vector.extract_strided_slice %95 {offsets = [0, 32], sizes = [2, 32], strides = [1, 1]} : vector<2x64xf32> to vector<2x32xf32>
    %c10 = arith.constant 10 : index
    %c32_26 = arith.constant 32 : index
    %99 = vector.load %arg8[%c10, %c32_26] : memref<16x64xf32, #tpu.memory_space<vmem>>, vector<2x32xf32>
    tpu.vector_store %arg8[%c10, %c32_26], %98 {strides = array<i32>} : memref<16x64xf32, #tpu.memory_space<vmem>>, vector<2x32xf32>,
    %cst_27 = arith.constant 1.000000e+00 : f32
    %100 = vector.broadcast %cst_27 : f32 to vector<2x64xf32>
    %101 = arith.subf %100, %94 : vector<2x64xf32>
    %102 = arith.mulf %101, %70 : vector<2x64xf32>
    %103 = arith.addf %95, %102 : vector<2x64xf32>
    %104 = arith.mulf %94, %91 : vector<2x64xf32>
    %cst_28 = arith.constant 1.000000e+00 : f32
    %105 = vector.broadcast %cst_28 : f32 to vector<2x64xf32>
    %106 = arith.subf %105, %94 : vector<2x64xf32>
    %107 = arith.mulf %106, %75 : vector<2x64xf32>
    %108 = arith.addf %104, %107 : vector<2x64xf32>
    %109 = vector.extract_strided_slice %5 {offsets = [6, 0], sizes = [2, 256], strides = [1, 1]} : vector<16x256xf32> to vector<2x256xf32>
    %cst_29 = arith.constant dense<0.000000e+00> : vector<2x256xf32>
    %110 = tpu.matmul %103, %7, %cst_29 {dimension_numbers = #tpu.dot_dimension_numbers<[1], [0], [0], [1], [0, 0, 1, 1], [], []>} : vector<2x64xf32>, vector<64x256xf32>, vector<2x256xf32> -> vector<2x256xf32>
    %111 = arith.addf %109, %110 : vector<2x256xf32>
    %112 = arith.negf %111 : vector<2x256xf32>
    %113 = math.exp %112 : vector<2x256xf32>
    %cst_30 = arith.constant 1.000000e+00 : f32
    %114 = vector.broadcast %cst_30 : f32 to vector<2x256xf32>
    %115 = arith.addf %114, %113 : vector<2x256xf32>
    %116 = arith.divf %114, %115 : vector<2x256xf32>
    %117 = math.tanh %111 : vector<2x256xf32>
    %118 = vector.extract_strided_slice %116 {offsets = [0, 0], sizes = [2, 64], strides = [1, 1]} : vector<2x256xf32> to vector<2x64xf32>
    %119 = vector.extract_strided_slice %116 {offsets = [0, 64], sizes = [2, 64], strides = [1, 1]} : vector<2x256xf32> to vector<2x64xf32>
    %120 = vector.extract_strided_slice %117 {offsets = [0, 128], sizes = [2, 64], strides = [1, 1]} : vector<2x256xf32> to vector<2x64xf32>
    %121 = vector.extract_strided_slice %116 {offsets = [0, 192], sizes = [2, 64], strides = [1, 1]} : vector<2x256xf32> to vector<2x64xf32>
    %122 = arith.mulf %119, %108 : vector<2x64xf32>
    %123 = arith.mulf %118, %120 : vector<2x64xf32>
    %124 = arith.addf %122, %123 : vector<2x64xf32>
    %125 = math.tanh %124 : vector<2x64xf32>
    %126 = arith.mulf %121, %125 : vector<2x64xf32>
    %127 = vector.extract_strided_slice %6 {offsets = [6, 0], sizes = [2, 64], strides = [1, 1]} : vector<16x64xf32> to vector<2x64xf32>
    %128 = arith.mulf %127, %126 : vector<2x64xf32>
    %129 = vector.extract_strided_slice %128 {offsets = [0, 0], sizes = [2, 32], strides = [1, 1]} : vector<2x64xf32> to vector<2x32xf32>
    %c6 = arith.constant 6 : index
    %c0_31 = arith.constant 0 : index
    %130 = vector.load %arg8[%c6, %c0_31] : memref<16x64xf32, #tpu.memory_space<vmem>>, vector<2x32xf32>
    tpu.vector_store %arg8[%c6, %c0_31], %129 {strides = array<i32>} : memref<16x64xf32, #tpu.memory_space<vmem>>, vector<2x32xf32>,
    %131 = vector.extract_strided_slice %128 {offsets = [0, 32], sizes = [2, 32], strides = [1, 1]} : vector<2x64xf32> to vector<2x32xf32>
    %c8 = arith.constant 8 : index
    %c32_32 = arith.constant 32 : index
    %132 = vector.load %arg8[%c8, %c32_32] : memref<16x64xf32, #tpu.memory_space<vmem>>, vector<2x32xf32>
    tpu.vector_store %arg8[%c8, %c32_32], %131 {strides = array<i32>} : memref<16x64xf32, #tpu.memory_space<vmem>>, vector<2x32xf32>,
    %cst_33 = arith.constant 1.000000e+00 : f32
    %133 = vector.broadcast %cst_33 : f32 to vector<2x64xf32>
    %134 = arith.subf %133, %127 : vector<2x64xf32>
    %135 = arith.mulf %134, %103 : vector<2x64xf32>
    %136 = arith.addf %128, %135 : vector<2x64xf32>
    %137 = arith.mulf %127, %124 : vector<2x64xf32>
    %cst_34 = arith.constant 1.000000e+00 : f32
    %138 = vector.broadcast %cst_34 : f32 to vector<2x64xf32>
    %139 = arith.subf %138, %127 : vector<2x64xf32>
    %140 = arith.mulf %139, %108 : vector<2x64xf32>
    %141 = arith.addf %137, %140 : vector<2x64xf32>
    %142 = vector.extract_strided_slice %5 {offsets = [8, 0], sizes = [2, 256], strides = [1, 1]} : vector<16x256xf32> to vector<2x256xf32>
    %cst_35 = arith.constant dense<0.000000e+00> : vector<2x256xf32>
    %143 = tpu.matmul %136, %7, %cst_35 {dimension_numbers = #tpu.dot_dimension_numbers<[1], [0], [0], [1], [0, 0, 1, 1], [], []>} : vector<2x64xf32>, vector<64x256xf32>, vector<2x256xf32> -> vector<2x256xf32>
    %144 = arith.addf %142, %143 : vector<2x256xf32>
    %145 = arith.negf %144 : vector<2x256xf32>
    %146 = math.exp %145 : vector<2x256xf32>
    %cst_36 = arith.constant 1.000000e+00 : f32
    %147 = vector.broadcast %cst_36 : f32 to vector<2x256xf32>
    %148 = arith.addf %147, %146 : vector<2x256xf32>
    %149 = arith.divf %147, %148 : vector<2x256xf32>
    %150 = math.tanh %144 : vector<2x256xf32>
    %151 = vector.extract_strided_slice %149 {offsets = [0, 0], sizes = [2, 64], strides = [1, 1]} : vector<2x256xf32> to vector<2x64xf32>
    %152 = vector.extract_strided_slice %149 {offsets = [0, 64], sizes = [2, 64], strides = [1, 1]} : vector<2x256xf32> to vector<2x64xf32>
    %153 = vector.extract_strided_slice %150 {offsets = [0, 128], sizes = [2, 64], strides = [1, 1]} : vector<2x256xf32> to vector<2x64xf32>
    %154 = vector.extract_strided_slice %149 {offsets = [0, 192], sizes = [2, 64], strides = [1, 1]} : vector<2x256xf32> to vector<2x64xf32>
    %155 = arith.mulf %152, %141 : vector<2x64xf32>
    %156 = arith.mulf %151, %153 : vector<2x64xf32>
    %157 = arith.addf %155, %156 : vector<2x64xf32>
    %158 = math.tanh %157 : vector<2x64xf32>
    %159 = arith.mulf %154, %158 : vector<2x64xf32>
    %160 = vector.extract_strided_slice %6 {offsets = [8, 0], sizes = [2, 64], strides = [1, 1]} : vector<16x64xf32> to vector<2x64xf32>
    %161 = arith.mulf %160, %159 : vector<2x64xf32>
    %162 = vector.extract_strided_slice %161 {offsets = [0, 0], sizes = [2, 32], strides = [1, 1]} : vector<2x64xf32> to vector<2x32xf32>
    %c8_37 = arith.constant 8 : index
    %c0_38 = arith.constant 0 : index
    %163 = vector.load %arg8[%c8_37, %c0_38] : memref<16x64xf32, #tpu.memory_space<vmem>>, vector<2x32xf32>
    tpu.vector_store %arg8[%c8_37, %c0_38], %162 {strides = array<i32>} : memref<16x64xf32, #tpu.memory_space<vmem>>, vector<2x32xf32>,
    %164 = vector.extract_strided_slice %161 {offsets = [0, 32], sizes = [2, 32], strides = [1, 1]} : vector<2x64xf32> to vector<2x32xf32>
    %c6_39 = arith.constant 6 : index
    %c32_40 = arith.constant 32 : index
    %165 = vector.load %arg8[%c6_39, %c32_40] : memref<16x64xf32, #tpu.memory_space<vmem>>, vector<2x32xf32>
    tpu.vector_store %arg8[%c6_39, %c32_40], %164 {strides = array<i32>} : memref<16x64xf32, #tpu.memory_space<vmem>>, vector<2x32xf32>,
    %cst_41 = arith.constant 1.000000e+00 : f32
    %166 = vector.broadcast %cst_41 : f32 to vector<2x64xf32>
    %167 = arith.subf %166, %160 : vector<2x64xf32>
    %168 = arith.mulf %167, %136 : vector<2x64xf32>
    %169 = arith.addf %161, %168 : vector<2x64xf32>
    %170 = arith.mulf %160, %157 : vector<2x64xf32>
    %cst_42 = arith.constant 1.000000e+00 : f32
    %171 = vector.broadcast %cst_42 : f32 to vector<2x64xf32>
    %172 = arith.subf %171, %160 : vector<2x64xf32>
    %173 = arith.mulf %172, %141 : vector<2x64xf32>
    %174 = arith.addf %170, %173 : vector<2x64xf32>
    %175 = vector.extract_strided_slice %5 {offsets = [10, 0], sizes = [2, 256], strides = [1, 1]} : vector<16x256xf32> to vector<2x256xf32>
    %cst_43 = arith.constant dense<0.000000e+00> : vector<2x256xf32>
    %176 = tpu.matmul %169, %7, %cst_43 {dimension_numbers = #tpu.dot_dimension_numbers<[1], [0], [0], [1], [0, 0, 1, 1], [], []>} : vector<2x64xf32>, vector<64x256xf32>, vector<2x256xf32> -> vector<2x256xf32>
    %177 = arith.addf %175, %176 : vector<2x256xf32>
    %178 = arith.negf %177 : vector<2x256xf32>
    %179 = math.exp %178 : vector<2x256xf32>
    %cst_44 = arith.constant 1.000000e+00 : f32
    %180 = vector.broadcast %cst_44 : f32 to vector<2x256xf32>
    %181 = arith.addf %180, %179 : vector<2x256xf32>
    %182 = arith.divf %180, %181 : vector<2x256xf32>
    %183 = math.tanh %177 : vector<2x256xf32>
    %184 = vector.extract_strided_slice %182 {offsets = [0, 0], sizes = [2, 64], strides = [1, 1]} : vector<2x256xf32> to vector<2x64xf32>
    %185 = vector.extract_strided_slice %182 {offsets = [0, 64], sizes = [2, 64], strides = [1, 1]} : vector<2x256xf32> to vector<2x64xf32>
    %186 = vector.extract_strided_slice %183 {offsets = [0, 128], sizes = [2, 64], strides = [1, 1]} : vector<2x256xf32> to vector<2x64xf32>
    %187 = vector.extract_strided_slice %182 {offsets = [0, 192], sizes = [2, 64], strides = [1, 1]} : vector<2x256xf32> to vector<2x64xf32>
    %188 = arith.mulf %185, %174 : vector<2x64xf32>
    %189 = arith.mulf %184, %186 : vector<2x64xf32>
    %190 = arith.addf %188, %189 : vector<2x64xf32>
    %191 = math.tanh %190 : vector<2x64xf32>
    %192 = arith.mulf %187, %191 : vector<2x64xf32>
    %193 = vector.extract_strided_slice %6 {offsets = [10, 0], sizes = [2, 64], strides = [1, 1]} : vector<16x64xf32> to vector<2x64xf32>
    %194 = arith.mulf %193, %192 : vector<2x64xf32>
    %195 = vector.extract_strided_slice %194 {offsets = [0, 0], sizes = [2, 32], strides = [1, 1]} : vector<2x64xf32> to vector<2x32xf32>
    %c10_45 = arith.constant 10 : index
    %c0_46 = arith.constant 0 : index
    %196 = vector.load %arg8[%c10_45, %c0_46] : memref<16x64xf32, #tpu.memory_space<vmem>>, vector<2x32xf32>
    tpu.vector_store %arg8[%c10_45, %c0_46], %195 {strides = array<i32>} : memref<16x64xf32, #tpu.memory_space<vmem>>, vector<2x32xf32>,
    %197 = vector.extract_strided_slice %194 {offsets = [0, 32], sizes = [2, 32], strides = [1, 1]} : vector<2x64xf32> to vector<2x32xf32>
    %c4_47 = arith.constant 4 : index
    %c32_48 = arith.constant 32 : index
    %198 = vector.load %arg8[%c4_47, %c32_48] : memref<16x64xf32, #tpu.memory_space<vmem>>, vector<2x32xf32>
    tpu.vector_store %arg8[%c4_47, %c32_48], %197 {strides = array<i32>} : memref<16x64xf32, #tpu.memory_space<vmem>>, vector<2x32xf32>,
    %cst_49 = arith.constant 1.000000e+00 : f32
    %199 = vector.broadcast %cst_49 : f32 to vector<2x64xf32>
    %200 = arith.subf %199, %193 : vector<2x64xf32>
    %201 = arith.mulf %200, %169 : vector<2x64xf32>
    %202 = arith.addf %194, %201 : vector<2x64xf32>
    %203 = arith.mulf %193, %190 : vector<2x64xf32>
    %cst_50 = arith.constant 1.000000e+00 : f32
    %204 = vector.broadcast %cst_50 : f32 to vector<2x64xf32>
    %205 = arith.subf %204, %193 : vector<2x64xf32>
    %206 = arith.mulf %205, %174 : vector<2x64xf32>
    %207 = arith.addf %203, %206 : vector<2x64xf32>
    %208 = vector.extract_strided_slice %5 {offsets = [12, 0], sizes = [2, 256], strides = [1, 1]} : vector<16x256xf32> to vector<2x256xf32>
    %cst_51 = arith.constant dense<0.000000e+00> : vector<2x256xf32>
    %209 = tpu.matmul %202, %7, %cst_51 {dimension_numbers = #tpu.dot_dimension_numbers<[1], [0], [0], [1], [0, 0, 1, 1], [], []>} : vector<2x64xf32>, vector<64x256xf32>, vector<2x256xf32> -> vector<2x256xf32>
    %210 = arith.addf %208, %209 : vector<2x256xf32>
    %211 = arith.negf %210 : vector<2x256xf32>
    %212 = math.exp %211 : vector<2x256xf32>
    %cst_52 = arith.constant 1.000000e+00 : f32
    %213 = vector.broadcast %cst_52 : f32 to vector<2x256xf32>
    %214 = arith.addf %213, %212 : vector<2x256xf32>
    %215 = arith.divf %213, %214 : vector<2x256xf32>
    %216 = math.tanh %210 : vector<2x256xf32>
    %217 = vector.extract_strided_slice %215 {offsets = [0, 0], sizes = [2, 64], strides = [1, 1]} : vector<2x256xf32> to vector<2x64xf32>
    %218 = vector.extract_strided_slice %215 {offsets = [0, 64], sizes = [2, 64], strides = [1, 1]} : vector<2x256xf32> to vector<2x64xf32>
    %219 = vector.extract_strided_slice %216 {offsets = [0, 128], sizes = [2, 64], strides = [1, 1]} : vector<2x256xf32> to vector<2x64xf32>
    %220 = vector.extract_strided_slice %215 {offsets = [0, 192], sizes = [2, 64], strides = [1, 1]} : vector<2x256xf32> to vector<2x64xf32>
    %221 = arith.mulf %218, %207 : vector<2x64xf32>
    %222 = arith.mulf %217, %219 : vector<2x64xf32>
    %223 = arith.addf %221, %222 : vector<2x64xf32>
    %224 = math.tanh %223 : vector<2x64xf32>
    %225 = arith.mulf %220, %224 : vector<2x64xf32>
    %226 = vector.extract_strided_slice %6 {offsets = [12, 0], sizes = [2, 64], strides = [1, 1]} : vector<16x64xf32> to vector<2x64xf32>
    %227 = arith.mulf %226, %225 : vector<2x64xf32>
    %228 = vector.extract_strided_slice %227 {offsets = [0, 0], sizes = [2, 32], strides = [1, 1]} : vector<2x64xf32> to vector<2x32xf32>
    %c12_53 = arith.constant 12 : index
    %c0_54 = arith.constant 0 : index
    %229 = vector.load %arg8[%c12_53, %c0_54] : memref<16x64xf32, #tpu.memory_space<vmem>>, vector<2x32xf32>
    tpu.vector_store %arg8[%c12_53, %c0_54], %228 {strides = array<i32>} : memref<16x64xf32, #tpu.memory_space<vmem>>, vector<2x32xf32>,
    %230 = vector.extract_strided_slice %227 {offsets = [0, 32], sizes = [2, 32], strides = [1, 1]} : vector<2x64xf32> to vector<2x32xf32>
    %c2_55 = arith.constant 2 : index
    %c32_56 = arith.constant 32 : index
    %231 = vector.load %arg8[%c2_55, %c32_56] : memref<16x64xf32, #tpu.memory_space<vmem>>, vector<2x32xf32>
    tpu.vector_store %arg8[%c2_55, %c32_56], %230 {strides = array<i32>} : memref<16x64xf32, #tpu.memory_space<vmem>>, vector<2x32xf32>,
    %cst_57 = arith.constant 1.000000e+00 : f32
    %232 = vector.broadcast %cst_57 : f32 to vector<2x64xf32>
    %233 = arith.subf %232, %226 : vector<2x64xf32>
    %234 = arith.mulf %233, %202 : vector<2x64xf32>
    %235 = arith.addf %227, %234 : vector<2x64xf32>
    %236 = arith.mulf %226, %223 : vector<2x64xf32>
    %cst_58 = arith.constant 1.000000e+00 : f32
    %237 = vector.broadcast %cst_58 : f32 to vector<2x64xf32>
    %238 = arith.subf %237, %226 : vector<2x64xf32>
    %239 = arith.mulf %238, %207 : vector<2x64xf32>
    %240 = arith.addf %236, %239 : vector<2x64xf32>
    %241 = vector.extract_strided_slice %5 {offsets = [14, 0], sizes = [2, 256], strides = [1, 1]} : vector<16x256xf32> to vector<2x256xf32>
    %cst_59 = arith.constant dense<0.000000e+00> : vector<2x256xf32>
    %242 = tpu.matmul %235, %7, %cst_59 {dimension_numbers = #tpu.dot_dimension_numbers<[1], [0], [0], [1], [0, 0, 1, 1], [], []>} : vector<2x64xf32>, vector<64x256xf32>, vector<2x256xf32> -> vector<2x256xf32>
    %243 = arith.addf %241, %242 : vector<2x256xf32>
    %244 = arith.negf %243 : vector<2x256xf32>
    %245 = math.exp %244 : vector<2x256xf32>
    %cst_60 = arith.constant 1.000000e+00 : f32
    %246 = vector.broadcast %cst_60 : f32 to vector<2x256xf32>
    %247 = arith.addf %246, %245 : vector<2x256xf32>
    %248 = arith.divf %246, %247 : vector<2x256xf32>
    %249 = math.tanh %243 : vector<2x256xf32>
    %250 = vector.extract_strided_slice %248 {offsets = [0, 0], sizes = [2, 64], strides = [1, 1]} : vector<2x256xf32> to vector<2x64xf32>
    %251 = vector.extract_strided_slice %248 {offsets = [0, 64], sizes = [2, 64], strides = [1, 1]} : vector<2x256xf32> to vector<2x64xf32>
    %252 = vector.extract_strided_slice %249 {offsets = [0, 128], sizes = [2, 64], strides = [1, 1]} : vector<2x256xf32> to vector<2x64xf32>
    %253 = vector.extract_strided_slice %248 {offsets = [0, 192], sizes = [2, 64], strides = [1, 1]} : vector<2x256xf32> to vector<2x64xf32>
    %254 = arith.mulf %251, %240 : vector<2x64xf32>
    %255 = arith.mulf %250, %252 : vector<2x64xf32>
    %256 = arith.addf %254, %255 : vector<2x64xf32>
    %257 = math.tanh %256 : vector<2x64xf32>
    %258 = arith.mulf %253, %257 : vector<2x64xf32>
    %259 = vector.extract_strided_slice %6 {offsets = [14, 0], sizes = [2, 64], strides = [1, 1]} : vector<16x64xf32> to vector<2x64xf32>
    %260 = arith.mulf %259, %258 : vector<2x64xf32>
    %261 = vector.extract_strided_slice %260 {offsets = [0, 0], sizes = [2, 32], strides = [1, 1]} : vector<2x64xf32> to vector<2x32xf32>
    %c14_61 = arith.constant 14 : index
    %c0_62 = arith.constant 0 : index
    %262 = vector.load %arg8[%c14_61, %c0_62] : memref<16x64xf32, #tpu.memory_space<vmem>>, vector<2x32xf32>
    tpu.vector_store %arg8[%c14_61, %c0_62], %261 {strides = array<i32>} : memref<16x64xf32, #tpu.memory_space<vmem>>, vector<2x32xf32>,
    %263 = vector.extract_strided_slice %260 {offsets = [0, 32], sizes = [2, 32], strides = [1, 1]} : vector<2x64xf32> to vector<2x32xf32>
    %c0_63 = arith.constant 0 : index
    %c32_64 = arith.constant 32 : index
    %264 = vector.load %arg8[%c0_63, %c32_64] : memref<16x64xf32, #tpu.memory_space<vmem>>, vector<2x32xf32>
    tpu.vector_store %arg8[%c0_63, %c32_64], %263 {strides = array<i32>} : memref<16x64xf32, #tpu.memory_space<vmem>>, vector<2x32xf32>,
    %c0_65 = arith.constant 0 : index
    %c0_66 = arith.constant 0 : index
    %265 = vector.load %arg8[%c0_65, %c0_66] : memref<16x64xf32, #tpu.memory_space<vmem>>, vector<16x64xf32>
    %c0_67 = arith.constant 0 : index
    %c0_68 = arith.constant 0 : index
    %266 = vector.load %arg5[%c0_67, %c0_68] : memref<64x128xf32, #tpu.memory_space<vmem>>, vector<64x128xf32>
    %cst_69 = arith.constant dense<0.000000e+00> : vector<16x128xf32>
    %267 = tpu.matmul %265, %266, %cst_69 {dimension_numbers = #tpu.dot_dimension_numbers<[1], [0], [0], [1], [0, 0, 1, 1], [], []>} : vector<16x64xf32>, vector<64x128xf32>, vector<16x128xf32> -> vector<16x128xf32>
    %c0_70 = arith.constant 0 : index
    %c0_71 = arith.constant 0 : index
    %268 = vector.load %arg6[%c0_70, %c0_71] : memref<1x128xf32, #tpu.memory_space<vmem>>, vector<1x128xf32>
    %269 = vector.broadcast %268 : vector<1x128xf32> to vector<16x128xf32>
    %270 = arith.addf %267, %269 : vector<16x128xf32>
    %c0_72 = arith.constant 0 : index
    %c0_73 = arith.constant 0 : index
    %271 = vector.load %arg7[%c0_72, %c0_73] : memref<16x128xf32, #tpu.memory_space<vmem>>, vector<16x128xf32>
    tpu.vector_store %arg7[%c0_72, %c0_73], %270 {strides = array<i32>} : memref<16x128xf32, #tpu.memory_space<vmem>>, vector<16x128xf32>,
    return
  }
}

</mosaic_0001>

<llo_original>
// kernel: tpu_custom_call.1
$region0: #{tpu_custom_call.1}
  #allocation0 [shape = 'u32[]', space=smem, size = 0x4, offset = 0x4, fixed_abs, tag = 'smem constant byte address 0x4 - core index']
  #allocation1 [shape = 'u32[144,128]{1,0:T(1,128)}', space=vmem, size = 0x12000, scoped, tag = 'internal scratch']
  #allocation2 [shape = 'f32[16,64]{1,0:T(8,128)}', space=vmem, size = 0x2000, scoped, tag = 'scratch operand']
  %s0 = inlined_call_operand.hbm [shape: f32[16,64], index: 0, kind: input, shape index: {}]
  %s1 = inlined_call_operand.hbm [shape: f32[16,64], index: 1, kind: input, shape index: {}]
  %s2 = inlined_call_operand.hbm [shape: f32[64,256], index: 2, kind: input, shape index: {}]
  %s3 = inlined_call_operand.vmem [shape: f32[1,256], index: 3, kind: input, shape index: {}]
  %s4 = inlined_call_operand.hbm [shape: f32[64,256], index: 4, kind: input, shape index: {}]
  %s5 = inlined_call_operand.hbm [shape: f32[64,128], index: 5, kind: input, shape index: {}]
  %s6 = inlined_call_operand.vmem [shape: f32[1,128], index: 6, kind: input, shape index: {}]
  %s7 = inlined_call_operand.hbm [shape: f32[16,128], index: 7, kind: output, shape index: {}]
  %s8 = sld [smem:[#allocation0]]
  $region58: #{tpu_custom_call.1} parent=0
    _
  %s10 = ssub.s32 1, %s8
  %s11 = scalar_select 0, %s10, %s8
  $region1: #{tpu_custom_call.1} parent=0
    #allocation3 [shape = 'u8[8192]{0}', space=vmem, size = 0x2000, scoped, tag = 'input window, operand 0, single buffered']
    #allocation4 [shape = 's32[1]{0}', space=sflag, size = 0x4, scoped, tag = 'scoped memory for tpu_custom_call.1']
    #allocation5 [shape = 's32[1]{0}', space=sflag, size = 0x4, scoped, tag = 'scoped memory for tpu_custom_call.1']
    #allocation6 [shape = 'u8[8192]{0}', space=vmem, size = 0x2000, scoped, tag = 'input window, operand 1, single buffered']
    #allocation7 [shape = 's32[1]{0}', space=sflag, size = 0x4, scoped, tag = 'scoped memory for tpu_custom_call.1']
    #allocation8 [shape = 'u8[65536]{0}', space=vmem, size = 0x10000, scoped, tag = 'input window, operand 2, single buffered']
    #allocation9 [shape = 'u8[65536]{0}', space=vmem, size = 0x10000, scoped, tag = 'input window, operand 4, single buffered']
    #allocation10 [shape = 's32[1]{0}', space=sflag, size = 0x4, scoped, tag = 'scoped memory for tpu_custom_call.1']
    #allocation11 [shape = 'u8[32768]{0}', space=vmem, size = 0x8000, scoped, tag = 'input window, operand 5, single buffered']
    #allocation12 [shape = 'u8[8192]{0}', space=vmem, size = 0x2000, scoped, tag = 'output window, operand 0, single buffered']
    %12 = vsyncpa [#allocation4], 0
    %13 = vsyncpa [#allocation7], 0
    %14 = vsyncpa [#allocation10], 0
    %15 = vsyncpa [#allocation5], 0
    // Predicated region
    $region2: #{tpu_custom_call.1} parent=1 // pred_check
      _
    $region3: #{tpu_custom_call.1} parent=1 // pred_check_branch
      %17 = sbr.rel (0) target = $region5
    $region4: #{tpu_custom_call.1} parent=1 // pred_region
      %s19 = ssub.s32 256, 256
      %20 = vsyncadd [#allocation4], %s19
      %s21 = sshll.u32 [#allocation3], 4
      %s22 = int_to_ptr.vmem [resolvable:$true] %s21
      %27 = dma.hbm_to_vmem [thread:$0]  %s0, 256, %s22, [#allocation4], 128, 128, 8
    $region5: #{tpu_custom_call.1} parent=1 // pred_fallthru
      _
    // Predicated region
    $region6: #{tpu_custom_call.1} parent=1 // pred_check
      _
    $region7: #{tpu_custom_call.1} parent=1 // pred_check_branch
      %29 = sbr.rel (0) target = $region9
    $region8: #{tpu_custom_call.1} parent=1 // pred_region
      %s31 = ssub.s32 256, 256
      %32 = vsyncadd [#allocation7], %s31
      %s33 = sshll.u32 [#allocation6], 4
      %s34 = int_to_ptr.vmem [resolvable:$true] %s33
      %39 = dma.hbm_to_vmem [thread:$0]  %s1, 256, %s34, [#allocation7], 128, 128, 8
    $region9: #{tpu_custom_call.1} parent=1 // pred_fallthru
      _
    // Predicated region
    $region10: #{tpu_custom_call.1} parent=1 // pred_check
      _
    $region11: #{tpu_custom_call.1} parent=1 // pred_check_branch
      %41 = sbr.rel (0) target = $region13
    $region12: #{tpu_custom_call.1} parent=1 // pred_region
      %s43 = ssub.s32 2048, 2048
      %44 = vsyncadd [#allocation7], %s43
      %s45 = sshll.u32 [#allocation8], 4
      %s46 = int_to_ptr.vmem [resolvable:$true] %s45
      %51 = dma.hbm_to_vmem [thread:$0]  %s2, 2048, %s46, [#allocation7], 256, 256, 16
    $region13: #{tpu_custom_call.1} parent=1 // pred_fallthru
      _
    // Predicated region
    $region14: #{tpu_custom_call.1} parent=1 // pred_check
      _
    $region15: #{tpu_custom_call.1} parent=1 // pred_check_branch
      %53 = sbr.rel (0) target = $region17
    $region16: #{tpu_custom_call.1} parent=1 // pred_region
      _
    $region17: #{tpu_custom_call.1} parent=1 // pred_fallthru
      _
    // Predicated region
    $region18: #{tpu_custom_call.1} parent=1 // pred_check
      _
    $region19: #{tpu_custom_call.1} parent=1 // pred_check_branch
      %55 = sbr.rel (0) target = $region21
    $region20: #{tpu_custom_call.1} parent=1 // pred_region
      %s57 = ssub.s32 2048, 2048
      %58 = vsyncadd [#allocation10], %s57
      %s59 = sshll.u32 [#allocation9], 4
      %s60 = int_to_ptr.vmem [resolvable:$true] %s59
      %65 = dma.hbm_to_vmem [thread:$0]  %s4, 2048, %s60, [#allocation10], 256, 256, 16
    $region21: #{tpu_custom_call.1} parent=1 // pred_fallthru
      _
    // Predicated region
    $region22: #{tpu_custom_call.1} parent=1 // pred_check
      _
    $region23: #{tpu_custom_call.1} parent=1 // pred_check_branch
      %67 = sbr.rel (0) target = $region25
    $region24: #{tpu_custom_call.1} parent=1 // pred_region
      %s69 = ssub.s32 1024, 1024
      %70 = vsyncadd [#allocation10], %s69
      %s71 = sshll.u32 [#allocation11], 4
      %s72 = int_to_ptr.vmem [resolvable:$true] %s71
      %77 = dma.hbm_to_vmem [thread:$0]  %s5, 1024, %s72, [#allocation10], 128, 128, 8
    $region25: #{tpu_custom_call.1} parent=1 // pred_fallthru
      _
    // Predicated region
    $region26: #{tpu_custom_call.1} parent=1 // pred_check
      _
    $region27: #{tpu_custom_call.1} parent=1 // pred_check_branch
      %79 = sbr.rel (0) target = $region29
    $region28: #{tpu_custom_call.1} parent=1 // pred_region
      _
    $region29: #{tpu_custom_call.1} parent=1 // pred_fallthru
      _
    // Predicated region
    $region30: #{tpu_custom_call.1} parent=1 // pred_check
      _
    $region31: #{tpu_custom_call.1} parent=1 // pred_check_branch
      %81 = sbr.rel (0) target = $region33
    $region32: #{tpu_custom_call.1} parent=1 // pred_region
      %82 = dma.done [#allocation4], 256
    $region33: #{tpu_custom_call.1} parent=1 // pred_fallthru
      _
    // Predicated region
    $region34: #{tpu_custom_call.1} parent=1 // pred_check
      _
    $region35: #{tpu_custom_call.1} parent=1 // pred_check_branch
      %84 = sbr.rel (0) target = $region37
    $region36: #{tpu_custom_call.1} parent=1 // pred_region
      %85 = dma.done [#allocation7], 256
    $region37: #{tpu_custom_call.1} parent=1 // pred_fallthru
      _
    // Predicated region
    $region38: #{tpu_custom_call.1} parent=1 // pred_check
      _
    $region39: #{tpu_custom_call.1} parent=1 // pred_check_branch
      %87 = sbr.rel (0) target = $region41
    $region40: #{tpu_custom_call.1} parent=1 // pred_region
      %88 = dma.done [#allocation7], 2048
    $region41: #{tpu_custom_call.1} parent=1 // pred_fallthru
      _
    // Predicated region
    $region42: #{tpu_custom_call.1} parent=1 // pred_check
      _
    $region43: #{tpu_custom_call.1} parent=1 // pred_check_branch
      %90 = sbr.rel (0) target = $region45
    $region44: #{tpu_custom_call.1} parent=1 // pred_region
      %91 = dma.done [#allocation10], 2048
    $region45: #{tpu_custom_call.1} parent=1 // pred_fallthru
      _
    // Predicated region
    $region46: #{tpu_custom_call.1} parent=1 // pred_check
      _
    $region47: #{tpu_custom_call.1} parent=1 // pred_check_branch
      %93 = sbr.rel (0) target = $region49
    $region48: #{tpu_custom_call.1} parent=1 // pred_region
      %94 = dma.done [#allocation10], 1024
    $region49: #{tpu_custom_call.1} parent=1 // pred_fallthru
      _
    %v95 = vld [vmem:[#allocation6] sm:$0xff]
    %v96 = vld [vmem:[#allocation6 + $0x8] sm:$0xff]
    %v97 = vld [vmem:[#allocation8] sm:$0xff]
    %v98 = vld [vmem:[#allocation8 + $0x8] sm:$0xff]
    %v99 = vld [vmem:[#allocation8 + $0x10] sm:$0xff]
    %v100 = vld [vmem:[#allocation8 + $0x18] sm:$0xff]
    %v101 = vld [vmem:[#allocation8 + $0x20] sm:$0xff]
    %v102 = vld [vmem:[#allocation8 + $0x28] sm:$0xff]
    %v103 = vld [vmem:[#allocation8 + $0x30] sm:$0xff]
    %v104 = vld [vmem:[#allocation8 + $0x38] sm:$0xff]
    %v105 = vld [vmem:[#allocation8 + $0x40] sm:$0xff]
    %v106 = vld [vmem:[#allocation8 + $0x48] sm:$0xff]
    %v107 = vld [vmem:[#allocation8 + $0x50] sm:$0xff]
    %v108 = vld [vmem:[#allocation8 + $0x58] sm:$0xff]
    %v109 = vld [vmem:[#allocation8 + $0x60] sm:$0xff]
    %v110 = vld [vmem:[#allocation8 + $0x68] sm:$0xff]
    %v111 = vld [vmem:[#allocation8 + $0x70] sm:$0xff]
    %v112 = vld [vmem:[#allocation8 + $0x78] sm:$0xff]
    %v113 = vld [vmem:[%s3] sm:$0x3]
    %v115 = vlaneseq
    %v116 = vshrl.u32 %v115, 7
    %v117 = vsub.s32 0, %v116
    %v118 = vrot.slane %v113, %v117
    %v119 = vlaneseq
    %v120 = vshrl.u32 %v119, 7
    %v121 = vsub.s32 1, %v120
    %v122 = vrot.slane %v113, %v121
    %vm125 = vcmask 523264
    %v127 = vsel %vm125, %v95, 0
    %v130 = vsel %vm125, %v96, 0
    %132 = vmatprep.subr.mxu0 %v98
    %133 = vmatpush1.msra.mxu0 %v97
    %134 = vmatprep.subr.mxu0 %v100
    %135 = vmatpush1.msra.mxu0 %v99
    %136 = vmatprep.subr.mxu0 %v102
    %137 = vmatpush1.msra.mxu0 %v101
    %138 = vmatprep.subr.mxu0 %v104
    %139 = vmatpush1.msra.mxu0 %v103
    %140 = vmatprep.subr.mxu0 %v106
    %141 = vmatpush1.msra.mxu0 %v105
    %142 = vmatprep.subr.mxu0 %v108
    %143 = vmatpush1.msra.mxu0 %v107
    %144 = vmatprep.subr.mxu0 %v110
    %145 = vmatpush1.msra.mxu0 %v109
    %146 = vmatprep.subr.mxu0 %v112
    %147 = vmatpush1.msra.mxu0 %v111
    %148 = vmatprep.subr.mxu0 0.0
    %149 = vmatpush1.msra.mxu0 0.0
    %150 = vmatprep.subr.mxu0 0.0
    %151 = vmatpush1.msra.mxu0 0.0
    %152 = vmatprep.subr.mxu0 0.0
    %153 = vmatpush1.msra.mxu0 0.0
    %154 = vmatprep.subr.mxu0 0.0
    %155 = vmatpush1.msra.mxu0 0.0
    %156 = vmatprep.subr.mxu0 0.0
    %157 = vmatpush1.msra.mxu0 0.0
    %158 = vmatprep.subr.mxu0 0.0
    %159 = vmatpush1.msra.mxu0 0.0
    %160 = vmatprep.subr.mxu0 0.0
    %161 = vmatpush1.msra.mxu0 0.0
    %162 = vmatprep.subr.mxu0 0.0
    %163 = vmatpush1.msra.mxu0 0.0
    %164 = vmatprep.subr.mxu0 0.0
    %165 = vmatpush1.msra.mxu0 0.0
    %166 = vmatprep.subr.mxu0 0.0
    %167 = vmatpush1.msra.mxu0 0.0
    %168 = vmatprep.subr.mxu0 0.0
    %169 = vmatpush1.msra.mxu0 0.0
    %170 = vmatprep.subr.mxu0 0.0
    %171 = vmatpush1.msra.mxu0 0.0
    %172 = vmatprep.subr.mxu0 0.0
    %173 = vmatpush1.msra.mxu0 0.0
    %174 = vmatprep.subr.mxu0 0.0
    %175 = vmatpush1.msra.mxu0 0.0
    %176 = vmatprep.subr.mxu0 0.0
    %177 = vmatpush1.msra.mxu0 0.0
    %178 = vmatprep.subr.mxu0 0.0
    %179 = vmatpush1.msra.mxu0 0.0
    %180 = vmatprep.subr.mxu0 0.0
    %181 = vmatpush1.msra.mxu0 0.0
    %182 = vmatprep.subr.mxu0 0.0
    %183 = vmatpush1.msra.mxu0 0.0
    %184 = vmatprep.subr.mxu0 0.0
    %185 = vmatpush1.msra.mxu0 0.0
    %186 = vmatprep.subr.mxu0 0.0
    %187 = vmatpush1.msra.mxu0 0.0
    %188 = vmatprep.subr.mxu0 0.0
    %189 = vmatpush1.msra.mxu0 0.0
    %190 = vmatprep.subr.mxu0 0.0
    %191 = vmatpush1.msra.mxu0 0.0
    %192 = vmatprep.subr.mxu0 0.0
    %193 = vmatpush1.msra.mxu0 0.0
    %194 = vmatprep.subr.mxu0 0.0
    %195 = vmatpush1.msra.mxu0 0.0
    %196 = vmatprep.mubr.f32.mxu0 0.0
    %197 = vmatmul.mubr.f32.gmra.mrb[0].mxu0 %v127
    %v198 = vpop.f32.mrb[0].mxu0
    %v199 = vadd.f32 %v118, %v198
    %v200 = vpop.f32.mrb[0].mxu0
    %v201 = vadd.f32 %v122, %v200
    %202 = vmatprep.mubr.f32.mxu0 0.0
    %203 = vmatmul.mubr.f32.gmra.mrb[0].mxu0 %v130
    %v204 = vpop.f32.mrb[0].mxu0
    %v205 = vadd.f32 %v118, %v204
    %v206 = vpop.f32.mrb[0].mxu0
    %v207 = vadd.f32 %v122, %v206
    %208 = vdwg.mxu0
    %v209 = vld [vmem:[#allocation3] sm:$0xff]
    %v210 = vld [vmem:[#allocation3 + $0x8] sm:$0xff]
    %v211 = vld [vmem:[#allocation9] sm:$0xff]
    %v212 = vld [vmem:[#allocation9 + $0x8] sm:$0xff]
    %v213 = vld [vmem:[#allocation9 + $0x10] sm:$0xff]
    %v214 = vld [vmem:[#allocation9 + $0x18] sm:$0xff]
    %v215 = vld [vmem:[#allocation9 + $0x20] sm:$0xff]
    %v216 = vld [vmem:[#allocation9 + $0x28] sm:$0xff]
    %v217 = vld [vmem:[#allocation9 + $0x30] sm:$0xff]
    %v218 = vld [vmem:[#allocation9 + $0x38] sm:$0xff]
    %v219 = vld [vmem:[#allocation9 + $0x40] sm:$0xff]
    %v220 = vld [vmem:[#allocation9 + $0x48] sm:$0xff]
    %v221 = vld [vmem:[#allocation9 + $0x50] sm:$0xff]
    %v222 = vld [vmem:[#allocation9 + $0x58] sm:$0xff]
    %v223 = vld [vmem:[#allocation9 + $0x60] sm:$0xff]
    %v224 = vld [vmem:[#allocation9 + $0x68] sm:$0xff]
    %v225 = vld [vmem:[#allocation9 + $0x70] sm:$0xff]
    %v226 = vld [vmem:[#allocation9 + $0x78] sm:$0xff]
    %v228 = vsel %vm125, 0.0, 0
    %230 = vmatprep.subr.mxu0 %v212
    %231 = vmatpush1.msra.mxu0 %v211
    %232 = vmatprep.subr.mxu0 %v214
    %233 = vmatpush1.msra.mxu0 %v213
    %234 = vmatprep.subr.mxu0 %v216
    %235 = vmatpush1.msra.mxu0 %v215
    %236 = vmatprep.subr.mxu0 %v218
    %237 = vmatpush1.msra.mxu0 %v217
    %238 = vmatprep.subr.mxu0 %v220
    %239 = vmatpush1.msra.mxu0 %v219
    %240 = vmatprep.subr.mxu0 %v222
    %241 = vmatpush1.msra.mxu0 %v221
    %242 = vmatprep.subr.mxu0 %v224
    %243 = vmatpush1.msra.mxu0 %v223
    %244 = vmatprep.subr.mxu0 %v226
    %245 = vmatpush1.msra.mxu0 %v225
    %246 = vmatprep.subr.mxu0 0.0
    %247 = vmatpush1.msra.mxu0 0.0
    %248 = vmatprep.subr.mxu0 0.0
    %249 = vmatpush1.msra.mxu0 0.0
    %250 = vmatprep.subr.mxu0 0.0
    %251 = vmatpush1.msra.mxu0 0.0
    %252 = vmatprep.subr.mxu0 0.0
    %253 = vmatpush1.msra.mxu0 0.0
    %254 = vmatprep.subr.mxu0 0.0
    %255 = vmatpush1.msra.mxu0 0.0
    %256 = vmatprep.subr.mxu0 0.0
    %257 = vmatpush1.msra.mxu0 0.0
    %258 = vmatprep.subr.mxu0 0.0
    %259 = vmatpush1.msra.mxu0 0.0
    %260 = vmatprep.subr.mxu0 0.0
    %261 = vmatpush1.msra.mxu0 0.0
    %262 = vmatprep.subr.mxu0 0.0
    %263 = vmatpush1.msra.mxu0 0.0
    %264 = vmatprep.subr.mxu0 0.0
    %265 = vmatpush1.msra.mxu0 0.0
    %266 = vmatprep.subr.mxu0 0.0
    %267 = vmatpush1.msra.mxu0 0.0
    %268 = vmatprep.subr.mxu0 0.0
    %269 = vmatpush1.msra.mxu0 0.0
    %270 = vmatprep.subr.mxu0 0.0
    %271 = vmatpush1.msra.mxu0 0.0
    %272 = vmatprep.subr.mxu0 0.0
    %273 = vmatpush1.msra.mxu0 0.0
    %274 = vmatprep.subr.mxu0 0.0
    %275 = vmatpush1.msra.mxu0 0.0
    %276 = vmatprep.subr.mxu0 0.0
    %277 = vmatpush1.msra.mxu0 0.0
    %278 = vmatprep.subr.mxu0 0.0
    %279 = vmatpush1.msra.mxu0 0.0
    %280 = vmatprep.subr.mxu0 0.0
    %281 = vmatpush1.msra.mxu0 0.0
    %282 = vmatprep.subr.mxu0 0.0
    %283 = vmatpush1.msra.mxu0 0.0
    %284 = vmatprep.subr.mxu0 0.0
    %285 = vmatpush1.msra.mxu0 0.0
    %286 = vmatprep.subr.mxu0 0.0
    %287 = vmatpush1.msra.mxu0 0.0
    %288 = vmatprep.subr.mxu0 0.0
    %289 = vmatpush1.msra.mxu0 0.0
    %290 = vmatprep.subr.mxu0 0.0
    %291 = vmatpush1.msra.mxu0 0.0
    %292 = vmatprep.subr.mxu0 0.0
    %293 = vmatpush1.msra.mxu0 0.0
    %294 = vmatprep.mubr.f32.mxu0 0.0
    %295 = vmatmul.mubr.f32.gmra.mrb[0].mxu0 %v228
    %v296 = vpop.f32.mrb[0].mxu0
    %v297 = vadd.f32 0.0, %v296
    %v298 = vpop.f32.mrb[0].mxu0
    %v299 = vadd.f32 0.0, %v298
    %300 = vdwg.mxu0
    %v301 = vadd.f32 %v199, %v297
    %v302 = vadd.f32 %v201, %v299
    %v303 = vxor.u32 %v301, 2147483648
    %v304 = vxor.u32 %v302, 2147483648
    %v305 = vmul.f32 %v303, 1.442695
    %v306 = vpow.pop %v305
    %v307 = vmul.f32 %v304, 1.442695
    %v308 = vpow.pop %v307
    %v309 = vadd.f32 %v306, 1.0
    %v310 = vadd.f32 %v308, 1.0
    %v311 = vrcp.pop %v309
    %v312 = vmul.f32 1.0, %v311
    %v313 = vrcp.pop %v310
    %v314 = vmul.f32 1.0, %v313
    %v315 = vtanh.pop %v302
    %v316 = vmul.f32 %v312, 0.0
    %v317 = vmul.f32 %v312, %v315
    %319 = vrot.lane.b32.xlu0 %v317, 64
    %v320 = vpop.permute.xlu0 %319
    %v322 = vadd.f32 %v316, %v320
    %v323 = vtanh.pop %v322
    %v324 = vmul.f32 %v314, %v323
    %326 = vrot.lane.b32.xlu0 %v324, 64
    %v327 = vpop.permute.xlu0 %326
    %v329 = vmul.f32 %v209, %v327
    %vm330 = vcmask 254976
    %331 = vst.msk [vmem:[#allocation2] sm:$0x3] %vm330, %v329
    %vm332 = vcmask 517376
    %333 = vst.msk [vmem:[#allocation2 + $0xe] sm:$0x3] %vm332, %v329
    %v334 = vsub.f32 1.0, %v209
    %v335 = vmul.f32 %v334, 0.0
    %v336 = vadd.f32 %v329, %v335
    %338 = vrot.lane.b32.xlu0 %v322, 64
    %v339 = vpop.permute.xlu0 %338
    %v341 = vmul.f32 %v209, %v339
    %v342 = vadd.f32 %v341, %v335
    %v344 = vsel %vm125, %v336, 0
    %346 = vmatprep.subr.mxu0 %v212
    %347 = vmatpush1.msra.mxu0 %v211
    %348 = vmatprep.subr.mxu0 %v214
    %349 = vmatpush1.msra.mxu0 %v213
    %350 = vmatprep.subr.mxu0 %v216
    %351 = vmatpush1.msra.mxu0 %v215
    %352 = vmatprep.subr.mxu0 %v218
    %353 = vmatpush1.msra.mxu0 %v217
    %354 = vmatprep.subr.mxu0 %v220
    %355 = vmatpush1.msra.mxu0 %v219
    %356 = vmatprep.subr.mxu0 %v222
    %357 = vmatpush1.msra.mxu0 %v221
    %358 = vmatprep.subr.mxu0 %v224
    %359 = vmatpush1.msra.mxu0 %v223
    %360 = vmatprep.subr.mxu0 %v226
    %361 = vmatpush1.msra.mxu0 %v225
    %362 = vmatprep.subr.mxu0 0.0
    %363 = vmatpush1.msra.mxu0 0.0
    %364 = vmatprep.subr.mxu0 0.0
    %365 = vmatpush1.msra.mxu0 0.0
    %366 = vmatprep.subr.mxu0 0.0
    %367 = vmatpush1.msra.mxu0 0.0
    %368 = vmatprep.subr.mxu0 0.0
    %369 = vmatpush1.msra.mxu0 0.0
    %370 = vmatprep.subr.mxu0 0.0
    %371 = vmatpush1.msra.mxu0 0.0
    %372 = vmatprep.subr.mxu0 0.0
    %373 = vmatpush1.msra.mxu0 0.0
    %374 = vmatprep.subr.mxu0 0.0
    %375 = vmatpush1.msra.mxu0 0.0
    %376 = vmatprep.subr.mxu0 0.0
    %377 = vmatpush1.msra.mxu0 0.0
    %378 = vmatprep.subr.mxu0 0.0
    %379 = vmatpush1.msra.mxu0 0.0
    %380 = vmatprep.subr.mxu0 0.0
    %381 = vmatpush1.msra.mxu0 0.0
    %382 = vmatprep.subr.mxu0 0.0
    %383 = vmatpush1.msra.mxu0 0.0
    %384 = vmatprep.subr.mxu0 0.0
    %385 = vmatpush1.msra.mxu0 0.0
    %386 = vmatprep.subr.mxu0 0.0
    %387 = vmatpush1.msra.mxu0 0.0
    %388 = vmatprep.subr.mxu0 0.0
    %389 = vmatpush1.msra.mxu0 0.0
    %390 = vmatprep.subr.mxu0 0.0
    %391 = vmatpush1.msra.mxu0 0.0
    %392 = vmatprep.subr.mxu0 0.0
    %393 = vmatpush1.msra.mxu0 0.0
    %394 = vmatprep.subr.mxu0 0.0
    %395 = vmatpush1.msra.mxu0 0.0
    %396 = vmatprep.subr.mxu0 0.0
    %397 = vmatpush1.msra.mxu0 0.0
    %398 = vmatprep.subr.mxu0 0.0
    %399 = vmatpush1.msra.mxu0 0.0
    %400 = vmatprep.subr.mxu0 0.0
    %401 = vmatpush1.msra.mxu0 0.0
    %402 = vmatprep.subr.mxu0 0.0
    %403 = vmatpush1.msra.mxu0 0.0
    %404 = vmatprep.subr.mxu0 0.0
    %405 = vmatpush1.msra.mxu0 0.0
    %406 = vmatprep.subr.mxu0 0.0
    %407 = vmatpush1.msra.mxu0 0.0
    %408 = vmatprep.subr.mxu0 0.0
    %409 = vmatpush1.msra.mxu0 0.0
    %410 = vmatprep.mubr.f32.mxu0 0.0
    %411 = vmatmul.mubr.f32.gmra.mrb[0].mxu0 %v344
    %v412 = vpop.f32.mrb[0].mxu0
    %v413 = vadd.f32 0.0, %v412
    %v414 = vpop.f32.mrb[0].mxu0
    %v415 = vadd.f32 0.0, %v414
    %416 = vdwg.mxu0
    %v419 = vrot.slane %v413, 6
    %v420 = vrot.slane %v415, 6
    %v423 = vadd.f32 %v199, %v419
    %v424 = vadd.f32 %v201, %v420
    %v425 = vxor.u32 %v423, 2147483648
    %v426 = vxor.u32 %v424, 2147483648
    %v427 = vmul.f32 %v425, 1.442695
    %v428 = vpow.pop %v427
    %v429 = vmul.f32 %v426, 1.442695
    %v430 = vpow.pop %v429
    %v431 = vadd.f32 %v428, 1.0
    %v432 = vadd.f32 %v430, 1.0
    %v433 = vrcp.pop %v431
    %v434 = vmul.f32 1.0, %v433
    %v435 = vrcp.pop %v432
    %v436 = vmul.f32 1.0, %v435
    %v437 = vtanh.pop %v424
    %v439 = vrot.slane %v342, 6
    %440 = vrot.lane.b32.xlu0 %v439, 64
    %v441 = vpop.permute.xlu0 %440
    %v443 = vmul.f32 %v434, %v441
    %v444 = vmul.f32 %v434, %v437
    %446 = vrot.lane.b32.xlu0 %v444, 64
    %v447 = vpop.permute.xlu0 %446
    %v449 = vadd.f32 %v443, %v447
    %v450 = vtanh.pop %v449
    %v451 = vmul.f32 %v436, %v450
    %453 = vrot.lane.b32.xlu0 %v451, 64
    %v454 = vpop.permute.xlu0 %453
    %v456 = vmul.f32 %v209, %v454
    %vm457 = vcmask 257026
    %458 = vst.msk [vmem:[#allocation2] sm:$0xc] %vm457, %v456
    %vm459 = vcmask 519426
    %460 = vst.msk [vmem:[#allocation2 + $0xa] sm:$0xc] %vm459, %v456
    %v461 = vrot.slane %v336, 6
    %v463 = vmul.f32 %v334, %v461
    %v464 = vadd.f32 %v456, %v463
    %466 = vrot.lane.b32.xlu0 %v449, 64
    %v467 = vpop.permute.xlu0 %466
    %v469 = vmul.f32 %v209, %v467
    %v471 = vmul.f32 %v334, %v439
    %v472 = vadd.f32 %v469, %v471
    %v474 = vrot.slane %v464, 2
    %v475 = vsel %vm125, %v474, 0
    %477 = vmatprep.subr.mxu0 %v212
    %478 = vmatpush1.msra.mxu0 %v211
    %479 = vmatprep.subr.mxu0 %v214
    %480 = vmatpush1.msra.mxu0 %v213
    %481 = vmatprep.subr.mxu0 %v216
    %482 = vmatpush1.msra.mxu0 %v215
    %483 = vmatprep.subr.mxu0 %v218
    %484 = vmatpush1.msra.mxu0 %v217
    %485 = vmatprep.subr.mxu0 %v220
    %486 = vmatpush1.msra.mxu0 %v219
    %487 = vmatprep.subr.mxu0 %v222
    %488 = vmatpush1.msra.mxu0 %v221
    %489 = vmatprep.subr.mxu0 %v224
    %490 = vmatpush1.msra.mxu0 %v223
    %491 = vmatprep.subr.mxu0 %v226
    %492 = vmatpush1.msra.mxu0 %v225
    %493 = vmatprep.subr.mxu0 0.0
    %494 = vmatpush1.msra.mxu0 0.0
    %495 = vmatprep.subr.mxu0 0.0
    %496 = vmatpush1.msra.mxu0 0.0
    %497 = vmatprep.subr.mxu0 0.0
    %498 = vmatpush1.msra.mxu0 0.0
    %499 = vmatprep.subr.mxu0 0.0
    %500 = vmatpush1.msra.mxu0 0.0
    %501 = vmatprep.subr.mxu0 0.0
    %502 = vmatpush1.msra.mxu0 0.0
    %503 = vmatprep.subr.mxu0 0.0
    %504 = vmatpush1.msra.mxu0 0.0
    %505 = vmatprep.subr.mxu0 0.0
    %506 = vmatpush1.msra.mxu0 0.0
    %507 = vmatprep.subr.mxu0 0.0
    %508 = vmatpush1.msra.mxu0 0.0
    %509 = vmatprep.subr.mxu0 0.0
    %510 = vmatpush1.msra.mxu0 0.0
    %511 = vmatprep.subr.mxu0 0.0
    %512 = vmatpush1.msra.mxu0 0.0
    %513 = vmatprep.subr.mxu0 0.0
    %514 = vmatpush1.msra.mxu0 0.0
    %515 = vmatprep.subr.mxu0 0.0
    %516 = vmatpush1.msra.mxu0 0.0
    %517 = vmatprep.subr.mxu0 0.0
    %518 = vmatpush1.msra.mxu0 0.0
    %519 = vmatprep.subr.mxu0 0.0
    %520 = vmatpush1.msra.mxu0 0.0
    %521 = vmatprep.subr.mxu0 0.0
    %522 = vmatpush1.msra.mxu0 0.0
    %523 = vmatprep.subr.mxu0 0.0
    %524 = vmatpush1.msra.mxu0 0.0
    %525 = vmatprep.subr.mxu0 0.0
    %526 = vmatpush1.msra.mxu0 0.0
    %527 = vmatprep.subr.mxu0 0.0
    %528 = vmatpush1.msra.mxu0 0.0
    %529 = vmatprep.subr.mxu0 0.0
    %530 = vmatpush1.msra.mxu0 0.0
    %531 = vmatprep.subr.mxu0 0.0
    %532 = vmatpush1.msra.mxu0 0.0
    %533 = vmatprep.subr.mxu0 0.0
    %534 = vmatpush1.msra.mxu0 0.0
    %535 = vmatprep.subr.mxu0 0.0
    %536 = vmatpush1.msra.mxu0 0.0
    %537 = vmatprep.subr.mxu0 0.0
    %538 = vmatpush1.msra.mxu0 0.0
    %539 = vmatprep.subr.mxu0 0.0
    %540 = vmatpush1.msra.mxu0 0.0
    %541 = vmatprep.mubr.f32.mxu0 0.0
    %542 = vmatmul.mubr.f32.gmra.mrb[0].mxu0 %v475
    %v543 = vpop.f32.mrb[0].mxu0
    %v544 = vadd.f32 0.0, %v543
    %v545 = vpop.f32.mrb[0].mxu0
    %v546 = vadd.f32 0.0, %v545
    %547 = vdwg.mxu0
    %v550 = vrot.slane %v544, 4
    %v551 = vrot.slane %v546, 4
    %v554 = vadd.f32 %v199, %v550
    %v555 = vadd.f32 %v201, %v551
    %v556 = vxor.u32 %v554, 2147483648
    %v557 = vxor.u32 %v555, 2147483648
    %v558 = vmul.f32 %v556, 1.442695
    %v559 = vpow.pop %v558
    %v560 = vmul.f32 %v557, 1.442695
    %v561 = vpow.pop %v560
    %v562 = vadd.f32 %v559, 1.0
    %v563 = vadd.f32 %v561, 1.0
    %v564 = vrcp.pop %v562
    %v565 = vmul.f32 1.0, %v564
    %v566 = vrcp.pop %v563
    %v567 = vmul.f32 1.0, %v566
    %v568 = vtanh.pop %v555
    %v570 = vrot.slane %v472, 6
    %571 = vrot.lane.b32.xlu0 %v570, 64
    %v572 = vpop.permute.xlu0 %571
    %v574 = vmul.f32 %v565, %v572
    %v575 = vmul.f32 %v565, %v568
    %577 = vrot.lane.b32.xlu0 %v575, 64
    %v578 = vpop.permute.xlu0 %577
    %v580 = vadd.f32 %v574, %v578
    %v581 = vtanh.pop %v580
    %v582 = vmul.f32 %v567, %v581
    %584 = vrot.lane.b32.xlu0 %v582, 64
    %v585 = vpop.permute.xlu0 %584
    %v587 = vmul.f32 %v209, %v585
    %vm588 = vcmask 259076
    %589 = vst.msk [vmem:[#allocation2] sm:$0x30] %vm588, %v587
    %vm590 = vcmask 521476
    %591 = vst.msk [vmem:[#allocation2 + $0x6] sm:$0x30] %vm590, %v587
    %v592 = vrot.slane %v464, 6
    %v594 = vmul.f32 %v334, %v592
    %v595 = vadd.f32 %v587, %v594
    %597 = vrot.lane.b32.xlu0 %v580, 64
    %v598 = vpop.permute.xlu0 %597
    %v600 = vmul.f32 %v209, %v598
    %v602 = vmul.f32 %v334, %v570
    %v603 = vadd.f32 %v600, %v602
    %v605 = vrot.slane %v595, 4
    %v606 = vsel %vm125, %v605, 0
    %608 = vmatprep.subr.mxu0 %v212
    %609 = vmatpush1.msra.mxu0 %v211
    %610 = vmatprep.subr.mxu0 %v214
    %611 = vmatpush1.msra.mxu0 %v213
    %612 = vmatprep.subr.mxu0 %v216
    %613 = vmatpush1.msra.mxu0 %v215
    %614 = vmatprep.subr.mxu0 %v218
    %615 = vmatpush1.msra.mxu0 %v217
    %616 = vmatprep.subr.mxu0 %v220
    %617 = vmatpush1.msra.mxu0 %v219
    %618 = vmatprep.subr.mxu0 %v222
    %619 = vmatpush1.msra.mxu0 %v221
    %620 = vmatprep.subr.mxu0 %v224
    %621 = vmatpush1.msra.mxu0 %v223
    %622 = vmatprep.subr.mxu0 %v226
    %623 = vmatpush1.msra.mxu0 %v225
    %624 = vmatprep.subr.mxu0 0.0
    %625 = vmatpush1.msra.mxu0 0.0
    %626 = vmatprep.subr.mxu0 0.0
    %627 = vmatpush1.msra.mxu0 0.0
    %628 = vmatprep.subr.mxu0 0.0
    %629 = vmatpush1.msra.mxu0 0.0
    %630 = vmatprep.subr.mxu0 0.0
    %631 = vmatpush1.msra.mxu0 0.0
    %632 = vmatprep.subr.mxu0 0.0
    %633 = vmatpush1.msra.mxu0 0.0
    %634 = vmatprep.subr.mxu0 0.0
    %635 = vmatpush1.msra.mxu0 0.0
    %636 = vmatprep.subr.mxu0 0.0
    %637 = vmatpush1.msra.mxu0 0.0
    %638 = vmatprep.subr.mxu0 0.0
    %639 = vmatpush1.msra.mxu0 0.0
    %640 = vmatprep.subr.mxu0 0.0
    %641 = vmatpush1.msra.mxu0 0.0
    %642 = vmatprep.subr.mxu0 0.0
    %643 = vmatpush1.msra.mxu0 0.0
    %644 = vmatprep.subr.mxu0 0.0
    %645 = vmatpush1.msra.mxu0 0.0
    %646 = vmatprep.subr.mxu0 0.0
    %647 = vmatpush1.msra.mxu0 0.0
    %648 = vmatprep.subr.mxu0 0.0
    %649 = vmatpush1.msra.mxu0 0.0
    %650 = vmatprep.subr.mxu0 0.0
    %651 = vmatpush1.msra.mxu0 0.0
    %652 = vmatprep.subr.mxu0 0.0
    %653 = vmatpush1.msra.mxu0 0.0
    %654 = vmatprep.subr.mxu0 0.0
    %655 = vmatpush1.msra.mxu0 0.0
    %656 = vmatprep.subr.mxu0 0.0
    %657 = vmatpush1.msra.mxu0 0.0
    %658 = vmatprep.subr.mxu0 0.0
    %659 = vmatpush1.msra.mxu0 0.0
    %660 = vmatprep.subr.mxu0 0.0
    %661 = vmatpush1.msra.mxu0 0.0
    %662 = vmatprep.subr.mxu0 0.0
    %663 = vmatpush1.msra.mxu0 0.0
    %664 = vmatprep.subr.mxu0 0.0
    %665 = vmatpush1.msra.mxu0 0.0
    %666 = vmatprep.subr.mxu0 0.0
    %667 = vmatpush1.msra.mxu0 0.0
    %668 = vmatprep.subr.mxu0 0.0
    %669 = vmatpush1.msra.mxu0 0.0
    %670 = vmatprep.subr.mxu0 0.0
    %671 = vmatpush1.msra.mxu0 0.0
    %672 = vmatprep.mubr.f32.mxu0 0.0
    %673 = vmatmul.mubr.f32.gmra.mrb[0].mxu0 %v606
    %v674 = vpop.f32.mrb[0].mxu0
    %v675 = vadd.f32 0.0, %v674
    %v676 = vpop.f32.mrb[0].mxu0
    %v677 = vadd.f32 0.0, %v676
    %678 = vdwg.mxu0
    %v681 = vrot.slane %v675, 2
    %v682 = vrot.slane %v677, 2
    %v685 = vadd.f32 %v199, %v681
    %v686 = vadd.f32 %v201, %v682
    %v687 = vxor.u32 %v685, 2147483648
    %v688 = vxor.u32 %v686, 2147483648
    %v689 = vmul.f32 %v687, 1.442695
    %v690 = vpow.pop %v689
    %v691 = vmul.f32 %v688, 1.442695
    %v692 = vpow.pop %v691
    %v693 = vadd.f32 %v690, 1.0
    %v694 = vadd.f32 %v692, 1.0
    %v695 = vrcp.pop %v693
    %v696 = vmul.f32 1.0, %v695
    %v697 = vrcp.pop %v694
    %v698 = vmul.f32 1.0, %v697
    %v699 = vtanh.pop %v686
    %v701 = vrot.slane %v603, 6
    %702 = vrot.lane.b32.xlu0 %v701, 64
    %v703 = vpop.permute.xlu0 %702
    %v705 = vmul.f32 %v696, %v703
    %v706 = vmul.f32 %v696, %v699
    %708 = vrot.lane.b32.xlu0 %v706, 64
    %v709 = vpop.permute.xlu0 %708
    %v711 = vadd.f32 %v705, %v709
    %v712 = vtanh.pop %v711
    %v713 = vmul.f32 %v698, %v712
    %715 = vrot.lane.b32.xlu0 %v713, 64
    %v716 = vpop.permute.xlu0 %715
    %v718 = vmul.f32 %v209, %v716
    %vm719 = vcmask 261126
    %720 = vst.msk [vmem:[#allocation2] sm:$0xc0] %vm719, %v718
    %vm721 = vcmask 523526
    %722 = vst.msk [vmem:[#allocation2 + $0x2] sm:$0xc0] %vm721, %v718
    %v723 = vrot.slane %v595, 6
    %v725 = vmul.f32 %v334, %v723
    %v726 = vadd.f32 %v718, %v725
    %728 = vrot.lane.b32.xlu0 %v711, 64
    %v729 = vpop.permute.xlu0 %728
    %v731 = vmul.f32 %v209, %v729
    %v733 = vmul.f32 %v334, %v701
    %v734 = vadd.f32 %v731, %v733
    %v736 = vrot.slane %v726, 6
    %v737 = vsel %vm125, %v736, 0
    %739 = vmatprep.subr.mxu0 %v212
    %740 = vmatpush1.msra.mxu0 %v211
    %741 = vmatprep.subr.mxu0 %v214
    %742 = vmatpush1.msra.mxu0 %v213
    %743 = vmatprep.subr.mxu0 %v216
    %744 = vmatpush1.msra.mxu0 %v215
    %745 = vmatprep.subr.mxu0 %v218
    %746 = vmatpush1.msra.mxu0 %v217
    %747 = vmatprep.subr.mxu0 %v220
    %748 = vmatpush1.msra.mxu0 %v219
    %749 = vmatprep.subr.mxu0 %v222
    %750 = vmatpush1.msra.mxu0 %v221
    %751 = vmatprep.subr.mxu0 %v224
    %752 = vmatpush1.msra.mxu0 %v223
    %753 = vmatprep.subr.mxu0 %v226
    %754 = vmatpush1.msra.mxu0 %v225
    %755 = vmatprep.subr.mxu0 0.0
    %756 = vmatpush1.msra.mxu0 0.0
    %757 = vmatprep.subr.mxu0 0.0
    %758 = vmatpush1.msra.mxu0 0.0
    %759 = vmatprep.subr.mxu0 0.0
    %760 = vmatpush1.msra.mxu0 0.0
    %761 = vmatprep.subr.mxu0 0.0
    %762 = vmatpush1.msra.mxu0 0.0
    %763 = vmatprep.subr.mxu0 0.0
    %764 = vmatpush1.msra.mxu0 0.0
    %765 = vmatprep.subr.mxu0 0.0
    %766 = vmatpush1.msra.mxu0 0.0
    %767 = vmatprep.subr.mxu0 0.0
    %768 = vmatpush1.msra.mxu0 0.0
    %769 = vmatprep.subr.mxu0 0.0
    %770 = vmatpush1.msra.mxu0 0.0
    %771 = vmatprep.subr.mxu0 0.0
    %772 = vmatpush1.msra.mxu0 0.0
    %773 = vmatprep.subr.mxu0 0.0
    %774 = vmatpush1.msra.mxu0 0.0
    %775 = vmatprep.subr.mxu0 0.0
    %776 = vmatpush1.msra.mxu0 0.0
    %777 = vmatprep.subr.mxu0 0.0
    %778 = vmatpush1.msra.mxu0 0.0
    %779 = vmatprep.subr.mxu0 0.0
    %780 = vmatpush1.msra.mxu0 0.0
    %781 = vmatprep.subr.mxu0 0.0
    %782 = vmatpush1.msra.mxu0 0.0
    %783 = vmatprep.subr.mxu0 0.0
    %784 = vmatpush1.msra.mxu0 0.0
    %785 = vmatprep.subr.mxu0 0.0
    %786 = vmatpush1.msra.mxu0 0.0
    %787 = vmatprep.subr.mxu0 0.0
    %788 = vmatpush1.msra.mxu0 0.0
    %789 = vmatprep.subr.mxu0 0.0
    %790 = vmatpush1.msra.mxu0 0.0
    %791 = vmatprep.subr.mxu0 0.0
    %792 = vmatpush1.msra.mxu0 0.0
    %793 = vmatprep.subr.mxu0 0.0
    %794 = vmatpush1.msra.mxu0 0.0
    %795 = vmatprep.subr.mxu0 0.0
    %796 = vmatpush1.msra.mxu0 0.0
    %797 = vmatprep.subr.mxu0 0.0
    %798 = vmatpush1.msra.mxu0 0.0
    %799 = vmatprep.subr.mxu0 0.0
    %800 = vmatpush1.msra.mxu0 0.0
    %801 = vmatprep.subr.mxu0 0.0
    %802 = vmatpush1.msra.mxu0 0.0
    %803 = vmatprep.mubr.f32.mxu0 0.0
    %804 = vmatmul.mubr.f32.gmra.mrb[0].mxu0 %v737
    %v805 = vpop.f32.mrb[0].mxu0
    %v806 = vadd.f32 0.0, %v805
    %v807 = vpop.f32.mrb[0].mxu0
    %v808 = vadd.f32 0.0, %v807
    %809 = vdwg.mxu0
    %v810 = vadd.f32 %v205, %v806
    %v811 = vadd.f32 %v207, %v808
    %v812 = vxor.u32 %v810, 2147483648
    %v813 = vxor.u32 %v811, 2147483648
    %v814 = vmul.f32 %v812, 1.442695
    %v815 = vpow.pop %v814
    %v816 = vmul.f32 %v813, 1.442695
    %v817 = vpow.pop %v816
    %v818 = vadd.f32 %v815, 1.0
    %v819 = vadd.f32 %v817, 1.0
    %v820 = vrcp.pop %v818
    %v821 = vmul.f32 1.0, %v820
    %v822 = vrcp.pop %v819
    %v823 = vmul.f32 1.0, %v822
    %v824 = vtanh.pop %v811
    %v826 = vrot.slane %v734, 6
    %827 = vrot.lane.b32.xlu0 %v826, 64
    %v828 = vpop.permute.xlu0 %827
    %v830 = vmul.f32 %v821, %v828
    %v831 = vmul.f32 %v821, %v824
    %833 = vrot.lane.b32.xlu0 %v831, 64
    %v834 = vpop.permute.xlu0 %833
    %v836 = vadd.f32 %v830, %v834
    %v837 = vtanh.pop %v836
    %v838 = vmul.f32 %v823, %v837
    %840 = vrot.lane.b32.xlu0 %v838, 64
    %v841 = vpop.permute.xlu0 %840
    %v843 = vmul.f32 %v210, %v841
    %844 = vst.msk [vmem:[#allocation2 + $0x8] sm:$0x3] %vm330, %v843
    %845 = vst.msk [vmem:[#allocation2 + $0x6] sm:$0x3] %vm332, %v843
    %v846 = vsub.f32 1.0, %v210
    %v848 = vmul.f32 %v846, %v736
    %v849 = vadd.f32 %v843, %v848
    %851 = vrot.lane.b32.xlu0 %v836, 64
    %v852 = vpop.permute.xlu0 %851
    %v854 = vmul.f32 %v210, %v852
    %v856 = vmul.f32 %v846, %v826
    %v857 = vadd.f32 %v854, %v856
    %v859 = vsel %vm125, %v849, 0
    %861 = vmatprep.subr.mxu0 %v212
    %862 = vmatpush1.msra.mxu0 %v211
    %863 = vmatprep.subr.mxu0 %v214
    %864 = vmatpush1.msra.mxu0 %v213
    %865 = vmatprep.subr.mxu0 %v216
    %866 = vmatpush1.msra.mxu0 %v215
    %867 = vmatprep.subr.mxu0 %v218
    %868 = vmatpush1.msra.mxu0 %v217
    %869 = vmatprep.subr.mxu0 %v220
    %870 = vmatpush1.msra.mxu0 %v219
    %871 = vmatprep.subr.mxu0 %v222
    %872 = vmatpush1.msra.mxu0 %v221
    %873 = vmatprep.subr.mxu0 %v224
    %874 = vmatpush1.msra.mxu0 %v223
    %875 = vmatprep.subr.mxu0 %v226
    %876 = vmatpush1.msra.mxu0 %v225
    %877 = vmatprep.subr.mxu0 0.0
    %878 = vmatpush1.msra.mxu0 0.0
    %879 = vmatprep.subr.mxu0 0.0
    %880 = vmatpush1.msra.mxu0 0.0
    %881 = vmatprep.subr.mxu0 0.0
    %882 = vmatpush1.msra.mxu0 0.0
    %883 = vmatprep.subr.mxu0 0.0
    %884 = vmatpush1.msra.mxu0 0.0
    %885 = vmatprep.subr.mxu0 0.0
    %886 = vmatpush1.msra.mxu0 0.0
    %887 = vmatprep.subr.mxu0 0.0
    %888 = vmatpush1.msra.mxu0 0.0
    %889 = vmatprep.subr.mxu0 0.0
    %890 = vmatpush1.msra.mxu0 0.0
    %891 = vmatprep.subr.mxu0 0.0
    %892 = vmatpush1.msra.mxu0 0.0
    %893 = vmatprep.subr.mxu0 0.0
    %894 = vmatpush1.msra.mxu0 0.0
    %895 = vmatprep.subr.mxu0 0.0
    %896 = vmatpush1.msra.mxu0 0.0
    %897 = vmatprep.subr.mxu0 0.0
    %898 = vmatpush1.msra.mxu0 0.0
    %899 = vmatprep.subr.mxu0 0.0
    %900 = vmatpush1.msra.mxu0 0.0
    %901 = vmatprep.subr.mxu0 0.0
    %902 = vmatpush1.msra.mxu0 0.0
    %903 = vmatprep.subr.mxu0 0.0
    %904 = vmatpush1.msra.mxu0 0.0
    %905 = vmatprep.subr.mxu0 0.0
    %906 = vmatpush1.msra.mxu0 0.0
    %907 = vmatprep.subr.mxu0 0.0
    %908 = vmatpush1.msra.mxu0 0.0
    %909 = vmatprep.subr.mxu0 0.0
    %910 = vmatpush1.msra.mxu0 0.0
    %911 = vmatprep.subr.mxu0 0.0
    %912 = vmatpush1.msra.mxu0 0.0
    %913 = vmatprep.subr.mxu0 0.0
    %914 = vmatpush1.msra.mxu0 0.0
    %915 = vmatprep.subr.mxu0 0.0
    %916 = vmatpush1.msra.mxu0 0.0
    %917 = vmatprep.subr.mxu0 0.0
    %918 = vmatpush1.msra.mxu0 0.0
    %919 = vmatprep.subr.mxu0 0.0
    %920 = vmatpush1.msra.mxu0 0.0
    %921 = vmatprep.subr.mxu0 0.0
    %922 = vmatpush1.msra.mxu0 0.0
    %923 = vmatprep.subr.mxu0 0.0
    %924 = vmatpush1.msra.mxu0 0.0
    %925 = vmatprep.mubr.f32.mxu0 0.0
    %926 = vmatmul.mubr.f32.gmra.mrb[0].mxu0 %v859
    %v927 = vpop.f32.mrb[0].mxu0
    %v928 = vadd.f32 0.0, %v927
    %v929 = vpop.f32.mrb[0].mxu0
    %v930 = vadd.f32 0.0, %v929
    %931 = vdwg.mxu0
    %v934 = vrot.slane %v928, 6
    %v935 = vrot.slane %v930, 6
    %v938 = vadd.f32 %v205, %v934
    %v939 = vadd.f32 %v207, %v935
    %v940 = vxor.u32 %v938, 2147483648
    %v941 = vxor.u32 %v939, 2147483648
    %v942 = vmul.f32 %v940, 1.442695
    %v943 = vpow.pop %v942
    %v944 = vmul.f32 %v941, 1.442695
    %v945 = vpow.pop %v944
    %v946 = vadd.f32 %v943, 1.0
    %v947 = vadd.f32 %v945, 1.0
    %v948 = vrcp.pop %v946
    %v949 = vmul.f32 1.0, %v948
    %v950 = vrcp.pop %v947
    %v951 = vmul.f32 1.0, %v950
    %v952 = vtanh.pop %v939
    %v954 = vrot.slane %v857, 6
    %955 = vrot.lane.b32.xlu0 %v954, 64
    %v956 = vpop.permute.xlu0 %955
    %v958 = vmul.f32 %v949, %v956
    %v959 = vmul.f32 %v949, %v952
    %961 = vrot.lane.b32.xlu0 %v959, 64
    %v962 = vpop.permute.xlu0 %961
    %v964 = vadd.f32 %v958, %v962
    %v965 = vtanh.pop %v964
    %v966 = vmul.f32 %v951, %v965
    %968 = vrot.lane.b32.xlu0 %v966, 64
    %v969 = vpop.permute.xlu0 %968
    %v971 = vmul.f32 %v210, %v969
    %972 = vst.msk [vmem:[#allocation2 + $0x8] sm:$0xc] %vm457, %v971
    %973 = vst.msk [vmem:[#allocation2 + $0x2] sm:$0xc] %vm459, %v971
    %v974 = vrot.slane %v849, 6
    %v976 = vmul.f32 %v846, %v974
    %v977 = vadd.f32 %v971, %v976
    %979 = vrot.lane.b32.xlu0 %v964, 64
    %v980 = vpop.permute.xlu0 %979
    %v982 = vmul.f32 %v210, %v980
    %v984 = vmul.f32 %v846, %v954
    %v985 = vadd.f32 %v982, %v984
    %v987 = vrot.slane %v977, 2
    %v988 = vsel %vm125, %v987, 0
    %990 = vmatprep.subr.mxu0 %v212
    %991 = vmatpush1.msra.mxu0 %v211
    %992 = vmatprep.subr.mxu0 %v214
    %993 = vmatpush1.msra.mxu0 %v213
    %994 = vmatprep.subr.mxu0 %v216
    %995 = vmatpush1.msra.mxu0 %v215
    %996 = vmatprep.subr.mxu0 %v218
    %997 = vmatpush1.msra.mxu0 %v217
    %998 = vmatprep.subr.mxu0 %v220
    %999 = vmatpush1.msra.mxu0 %v219
    %1000 = vmatprep.subr.mxu0 %v222
    %1001 = vmatpush1.msra.mxu0 %v221
    %1002 = vmatprep.subr.mxu0 %v224
    %1003 = vmatpush1.msra.mxu0 %v223
    %1004 = vmatprep.subr.mxu0 %v226
    %1005 = vmatpush1.msra.mxu0 %v225
    %1006 = vmatprep.subr.mxu0 0.0
    %1007 = vmatpush1.msra.mxu0 0.0
    %1008 = vmatprep.subr.mxu0 0.0
    %1009 = vmatpush1.msra.mxu0 0.0
    %1010 = vmatprep.subr.mxu0 0.0
    %1011 = vmatpush1.msra.mxu0 0.0
    %1012 = vmatprep.subr.mxu0 0.0
    %1013 = vmatpush1.msra.mxu0 0.0
    %1014 = vmatprep.subr.mxu0 0.0
    %1015 = vmatpush1.msra.mxu0 0.0
    %1016 = vmatprep.subr.mxu0 0.0
    %1017 = vmatpush1.msra.mxu0 0.0
    %1018 = vmatprep.subr.mxu0 0.0
    %1019 = vmatpush1.msra.mxu0 0.0
    %1020 = vmatprep.subr.mxu0 0.0
    %1021 = vmatpush1.msra.mxu0 0.0
    %1022 = vmatprep.subr.mxu0 0.0
    %1023 = vmatpush1.msra.mxu0 0.0
    %1024 = vmatprep.subr.mxu0 0.0
    %1025 = vmatpush1.msra.mxu0 0.0
    %1026 = vmatprep.subr.mxu0 0.0
    %1027 = vmatpush1.msra.mxu0 0.0
    %1028 = vmatprep.subr.mxu0 0.0
    %1029 = vmatpush1.msra.mxu0 0.0
    %1030 = vmatprep.subr.mxu0 0.0
    %1031 = vmatpush1.msra.mxu0 0.0
    %1032 = vmatprep.subr.mxu0 0.0
    %1033 = vmatpush1.msra.mxu0 0.0
    %1034 = vmatprep.subr.mxu0 0.0
    %1035 = vmatpush1.msra.mxu0 0.0
    %1036 = vmatprep.subr.mxu0 0.0
    %1037 = vmatpush1.msra.mxu0 0.0
    %1038 = vmatprep.subr.mxu0 0.0
    %1039 = vmatpush1.msra.mxu0 0.0
    %1040 = vmatprep.subr.mxu0 0.0
    %1041 = vmatpush1.msra.mxu0 0.0
    %1042 = vmatprep.subr.mxu0 0.0
    %1043 = vmatpush1.msra.mxu0 0.0
    %1044 = vmatprep.subr.mxu0 0.0
    %1045 = vmatpush1.msra.mxu0 0.0
    %1046 = vmatprep.subr.mxu0 0.0
    %1047 = vmatpush1.msra.mxu0 0.0
    %1048 = vmatprep.subr.mxu0 0.0
    %1049 = vmatpush1.msra.mxu0 0.0
    %1050 = vmatprep.subr.mxu0 0.0
    %1051 = vmatpush1.msra.mxu0 0.0
    %1052 = vmatprep.subr.mxu0 0.0
    %1053 = vmatpush1.msra.mxu0 0.0
    %1054 = vmatprep.mubr.f32.mxu0 0.0
    %1055 = vmatmul.mubr.f32.gmra.mrb[0].mxu0 %v988
    %v1056 = vpop.f32.mrb[0].mxu0
    %v1057 = vadd.f32 0.0, %v1056
    %v1058 = vpop.f32.mrb[0].mxu0
    %v1059 = vadd.f32 0.0, %v1058
    %1060 = vdwg.mxu0
    %v1063 = vrot.slane %v1057, 4
    %v1064 = vrot.slane %v1059, 4
    %v1067 = vadd.f32 %v205, %v1063
    %v1068 = vadd.f32 %v207, %v1064
    %v1069 = vxor.u32 %v1067, 2147483648
    %v1070 = vxor.u32 %v1068, 2147483648
    %v1071 = vmul.f32 %v1069, 1.442695
    %v1072 = vpow.pop %v1071
    %v1073 = vmul.f32 %v1070, 1.442695
    %v1074 = vpow.pop %v1073
    %v1075 = vadd.f32 %v1072, 1.0
    %v1076 = vadd.f32 %v1074, 1.0
    %v1077 = vrcp.pop %v1075
    %v1078 = vmul.f32 1.0, %v1077
    %v1079 = vrcp.pop %v1076
    %v1080 = vmul.f32 1.0, %v1079
    %v1081 = vtanh.pop %v1068
    %v1083 = vrot.slane %v985, 6
    %1084 = vrot.lane.b32.xlu0 %v1083, 64
    %v1085 = vpop.permute.xlu0 %1084
    %v1087 = vmul.f32 %v1078, %v1085
    %v1088 = vmul.f32 %v1078, %v1081
    %1090 = vrot.lane.b32.xlu0 %v1088, 64
    %v1091 = vpop.permute.xlu0 %1090
    %v1093 = vadd.f32 %v1087, %v1091
    %v1094 = vtanh.pop %v1093
    %v1095 = vmul.f32 %v1080, %v1094
    %1097 = vrot.lane.b32.xlu0 %v1095, 64
    %v1098 = vpop.permute.xlu0 %1097
    %v1100 = vmul.f32 %v210, %v1098
    %1101 = vst.msk [vmem:[#allocation2 + $0x8] sm:$0x30] %vm588, %v1100
    %1102 = vst.msk [vmem:[#allocation2 - $0x2] sm:$0x30] %vm590, %v1100
    %v1103 = vrot.slane %v977, 6
    %v1105 = vmul.f32 %v846, %v1103
    %v1106 = vadd.f32 %v1100, %v1105
    %1108 = vrot.lane.b32.xlu0 %v1093, 64
    %v1109 = vpop.permute.xlu0 %1108
    %v1111 = vmul.f32 %v210, %v1109
    %v1113 = vmul.f32 %v846, %v1083
    %v1114 = vadd.f32 %v1111, %v1113
    %v1116 = vrot.slane %v1106, 4
    %v1117 = vsel %vm125, %v1116, 0
    %1119 = vmatprep.subr.mxu0 %v212
    %1120 = vmatpush1.msra.mxu0 %v211
    %1121 = vmatprep.subr.mxu0 %v214
    %1122 = vmatpush1.msra.mxu0 %v213
    %1123 = vmatprep.subr.mxu0 %v216
    %1124 = vmatpush1.msra.mxu0 %v215
    %1125 = vmatprep.subr.mxu0 %v218
    %1126 = vmatpush1.msra.mxu0 %v217
    %1127 = vmatprep.subr.mxu0 %v220
    %1128 = vmatpush1.msra.mxu0 %v219
    %1129 = vmatprep.subr.mxu0 %v222
    %1130 = vmatpush1.msra.mxu0 %v221
    %1131 = vmatprep.subr.mxu0 %v224
    %1132 = vmatpush1.msra.mxu0 %v223
    %1133 = vmatprep.subr.mxu0 %v226
    %1134 = vmatpush1.msra.mxu0 %v225
    %1135 = vmatprep.subr.mxu0 0.0
    %1136 = vmatpush1.msra.mxu0 0.0
    %1137 = vmatprep.subr.mxu0 0.0
    %1138 = vmatpush1.msra.mxu0 0.0
    %1139 = vmatprep.subr.mxu0 0.0
    %1140 = vmatpush1.msra.mxu0 0.0
    %1141 = vmatprep.subr.mxu0 0.0
    %1142 = vmatpush1.msra.mxu0 0.0
    %1143 = vmatprep.subr.mxu0 0.0
    %1144 = vmatpush1.msra.mxu0 0.0
    %1145 = vmatprep.subr.mxu0 0.0
    %1146 = vmatpush1.msra.mxu0 0.0
    %1147 = vmatprep.subr.mxu0 0.0
    %1148 = vmatpush1.msra.mxu0 0.0
    %1149 = vmatprep.subr.mxu0 0.0
    %1150 = vmatpush1.msra.mxu0 0.0
    %1151 = vmatprep.subr.mxu0 0.0
    %1152 = vmatpush1.msra.mxu0 0.0
    %1153 = vmatprep.subr.mxu0 0.0
    %1154 = vmatpush1.msra.mxu0 0.0
    %1155 = vmatprep.subr.mxu0 0.0
    %1156 = vmatpush1.msra.mxu0 0.0
    %1157 = vmatprep.subr.mxu0 0.0
    %1158 = vmatpush1.msra.mxu0 0.0
    %1159 = vmatprep.subr.mxu0 0.0
    %1160 = vmatpush1.msra.mxu0 0.0
    %1161 = vmatprep.subr.mxu0 0.0
    %1162 = vmatpush1.msra.mxu0 0.0
    %1163 = vmatprep.subr.mxu0 0.0
    %1164 = vmatpush1.msra.mxu0 0.0
    %1165 = vmatprep.subr.mxu0 0.0
    %1166 = vmatpush1.msra.mxu0 0.0
    %1167 = vmatprep.subr.mxu0 0.0
    %1168 = vmatpush1.msra.mxu0 0.0
    %1169 = vmatprep.subr.mxu0 0.0
    %1170 = vmatpush1.msra.mxu0 0.0
    %1171 = vmatprep.subr.mxu0 0.0
    %1172 = vmatpush1.msra.mxu0 0.0
    %1173 = vmatprep.subr.mxu0 0.0
    %1174 = vmatpush1.msra.mxu0 0.0
    %1175 = vmatprep.subr.mxu0 0.0
    %1176 = vmatpush1.msra.mxu0 0.0
    %1177 = vmatprep.subr.mxu0 0.0
    %1178 = vmatpush1.msra.mxu0 0.0
    %1179 = vmatprep.subr.mxu0 0.0
    %1180 = vmatpush1.msra.mxu0 0.0
    %1181 = vmatprep.subr.mxu0 0.0
    %1182 = vmatpush1.msra.mxu0 0.0
    %1183 = vmatprep.mubr.f32.mxu0 0.0
    %1184 = vmatmul.mubr.f32.gmra.mrb[0].mxu0 %v1117
    %v1185 = vpop.f32.mrb[0].mxu0
    %v1186 = vadd.f32 0.0, %v1185
    %v1187 = vpop.f32.mrb[0].mxu0
    %v1188 = vadd.f32 0.0, %v1187
    %1189 = vdwg.mxu0
    %v1192 = vrot.slane %v1186, 2
    %v1193 = vrot.slane %v1188, 2
    %v1196 = vadd.f32 %v205, %v1192
    %v1197 = vadd.f32 %v207, %v1193
    %v1198 = vxor.u32 %v1196, 2147483648
    %v1199 = vxor.u32 %v1197, 2147483648
    %v1200 = vmul.f32 %v1198, 1.442695
    %v1201 = vpow.pop %v1200
    %v1202 = vmul.f32 %v1199, 1.442695
    %v1203 = vpow.pop %v1202
    %v1204 = vadd.f32 %v1201, 1.0
    %v1205 = vadd.f32 %v1203, 1.0
    %v1206 = vrcp.pop %v1204
    %v1207 = vmul.f32 1.0, %v1206
    %v1208 = vrcp.pop %v1205
    %v1209 = vmul.f32 1.0, %v1208
    %v1210 = vtanh.pop %v1197
    %v1212 = vrot.slane %v1114, 6
    %1213 = vrot.lane.b32.xlu0 %v1212, 64
    %v1214 = vpop.permute.xlu0 %1213
    %v1216 = vmul.f32 %v1207, %v1214
    %v1217 = vmul.f32 %v1207, %v1210
    %1219 = vrot.lane.b32.xlu0 %v1217, 64
    %v1220 = vpop.permute.xlu0 %1219
    %v1222 = vadd.f32 %v1216, %v1220
    %v1223 = vtanh.pop %v1222
    %v1224 = vmul.f32 %v1209, %v1223
    %1226 = vrot.lane.b32.xlu0 %v1224, 64
    %v1227 = vpop.permute.xlu0 %1226
    %v1229 = vmul.f32 %v210, %v1227
    %1230 = vst.msk [vmem:[#allocation2 + $0x8] sm:$0xc0] %vm719, %v1229
    %1231 = vst.msk [vmem:[#allocation2 - $0x6] sm:$0xc0] %vm721, %v1229
    %v1232 = vld [vmem:[#allocation2] sm:$0xff]
    %v1233 = vld [vmem:[#allocation2 + $0x8] sm:$0xff]
    %v1234 = vld [vmem:[#allocation11] sm:$0xff]
    %v1235 = vld [vmem:[#allocation11 + $0x8] sm:$0xff]
    %v1236 = vld [vmem:[#allocation11 + $0x10] sm:$0xff]
    %v1237 = vld [vmem:[#allocation11 + $0x18] sm:$0xff]
    %v1238 = vld [vmem:[#allocation11 + $0x20] sm:$0xff]
    %v1239 = vld [vmem:[#allocation11 + $0x28] sm:$0xff]
    %v1240 = vld [vmem:[#allocation11 + $0x30] sm:$0xff]
    %v1241 = vld [vmem:[#allocation11 + $0x38] sm:$0xff]
    %v1242 = vld [vmem:[%s6] sm:$0x1]
    %v1244 = vlaneseq
    %v1245 = vshrl.u32 %v1244, 7
    %v1246 = vsub.s32 0, %v1245
    %v1247 = vrot.slane %v1242, %v1246
    %v1250 = vsel %vm125, %v1232, 0
    %v1253 = vsel %vm125, %v1233, 0
    %1255 = vmatprep.subr.mxu0 0.0
    %1256 = vmatpush1.msra.mxu0 %v1234
    %1257 = vmatprep.subr.mxu0 0.0
    %1258 = vmatpush1.msra.mxu0 %v1235
    %1259 = vmatprep.subr.mxu0 0.0
    %1260 = vmatpush1.msra.mxu0 %v1236
    %1261 = vmatprep.subr.mxu0 0.0
    %1262 = vmatpush1.msra.mxu0 %v1237
    %1263 = vmatprep.subr.mxu0 0.0
    %1264 = vmatpush1.msra.mxu0 %v1238
    %1265 = vmatprep.subr.mxu0 0.0
    %1266 = vmatpush1.msra.mxu0 %v1239
    %1267 = vmatprep.subr.mxu0 0.0
    %1268 = vmatpush1.msra.mxu0 %v1240
    %1269 = vmatprep.subr.mxu0 0.0
    %1270 = vmatpush1.msra.mxu0 %v1241
    %1271 = vmatprep.subr.mxu0 0.0
    %1272 = vmatpush1.msra.mxu0 0.0
    %1273 = vmatprep.subr.mxu0 0.0
    %1274 = vmatpush1.msra.mxu0 0.0
    %1275 = vmatprep.subr.mxu0 0.0
    %1276 = vmatpush1.msra.mxu0 0.0
    %1277 = vmatprep.subr.mxu0 0.0
    %1278 = vmatpush1.msra.mxu0 0.0
    %1279 = vmatprep.subr.mxu0 0.0
    %1280 = vmatpush1.msra.mxu0 0.0
    %1281 = vmatprep.subr.mxu0 0.0
    %1282 = vmatpush1.msra.mxu0 0.0
    %1283 = vmatprep.subr.mxu0 0.0
    %1284 = vmatpush1.msra.mxu0 0.0
    %1285 = vmatprep.subr.mxu0 0.0
    %1286 = vmatpush1.msra.mxu0 0.0
    %1287 = vmatprep.subr.mxu0 0.0
    %1288 = vmatpush1.msra.mxu0 0.0
    %1289 = vmatprep.subr.mxu0 0.0
    %1290 = vmatpush1.msra.mxu0 0.0
    %1291 = vmatprep.subr.mxu0 0.0
    %1292 = vmatpush1.msra.mxu0 0.0
    %1293 = vmatprep.subr.mxu0 0.0
    %1294 = vmatpush1.msra.mxu0 0.0
    %1295 = vmatprep.subr.mxu0 0.0
    %1296 = vmatpush1.msra.mxu0 0.0
    %1297 = vmatprep.subr.mxu0 0.0
    %1298 = vmatpush1.msra.mxu0 0.0
    %1299 = vmatprep.subr.mxu0 0.0
    %1300 = vmatpush1.msra.mxu0 0.0
    %1301 = vmatprep.subr.mxu0 0.0
    %1302 = vmatpush1.msra.mxu0 0.0
    %1303 = vmatprep.subr.mxu0 0.0
    %1304 = vmatpush1.msra.mxu0 0.0
    %1305 = vmatprep.subr.mxu0 0.0
    %1306 = vmatpush1.msra.mxu0 0.0
    %1307 = vmatprep.subr.mxu0 0.0
    %1308 = vmatpush1.msra.mxu0 0.0
    %1309 = vmatprep.subr.mxu0 0.0
    %1310 = vmatpush1.msra.mxu0 0.0
    %1311 = vmatprep.subr.mxu0 0.0
    %1312 = vmatpush1.msra.mxu0 0.0
    %1313 = vmatprep.subr.mxu0 0.0
    %1314 = vmatpush1.msra.mxu0 0.0
    %1315 = vmatprep.subr.mxu0 0.0
    %1316 = vmatpush1.msra.mxu0 0.0
    %1317 = vmatprep.subr.mxu0 0.0
    %1318 = vmatpush1.msra.mxu0 0.0
    %1319 = vmatprep.mubr.f32.mxu0 0.0
    %1320 = vmatmul.mubr.f32.gmra.mrb[0].mxu0 %v1250
    %v1321 = vpop.f32.mrb[0].mxu0
    %v1322 = vadd.f32 %v1247, %v1321
    %v1323 = vpop.f32.mrb[0].mxu0
    %1324 = vmatprep.mubr.f32.mxu0 0.0
    %1325 = vmatmul.mubr.f32.gmra.mrb[0].mxu0 %v1253
    %v1326 = vpop.f32.mrb[0].mxu0
    %v1327 = vadd.f32 %v1247, %v1326
    %v1328 = vpop.f32.mrb[0].mxu0
    %1329 = vdwg.mxu0
    %1330 = vst [vmem:[#allocation12] sm:$0xff] %v1322
    %1331 = vst [vmem:[#allocation12 + $0x8] sm:$0xff] %v1327
    // Predicated region
    $region50: #{tpu_custom_call.1} parent=1 // pred_check
      _
    $region51: #{tpu_custom_call.1} parent=1 // pred_check_branch
      %1333 = sbr.rel (0) target = $region53
    $region52: #{tpu_custom_call.1} parent=1 // pred_region
      %s1335 = ssub.s32 256, 256
      %1336 = vsyncadd [#allocation5], %s1335
      %s1337 = sshll.u32 [#allocation12], 4
      %s1338 = int_to_ptr.vmem [resolvable:$true] %s1337
      %1343 = dma.vmem_to_hbm [thread:$0]  %s1338, 256, %s7, [#allocation5], 128, 128, 8
    $region53: #{tpu_custom_call.1} parent=1 // pred_fallthru
      _
    // Predicated region
    $region54: #{tpu_custom_call.1} parent=1 // pred_check
      _
    $region55: #{tpu_custom_call.1} parent=1 // pred_check_branch
      %1345 = sbr.rel (0) target = $region57
    $region56: #{tpu_custom_call.1} parent=1 // pred_region
      %1346 = dma.done [#allocation5], 256
    $region57: #{tpu_custom_call.1} parent=1 // pred_fallthru
      _
    %1347 = vsyncpa [#allocation4], 1
    %1348 = vsyncpa [#allocation7], 1
    %1349 = vsyncpa [#allocation10], 1
    %1350 = vsyncpa [#allocation5], 1

</llo_original>
